<compile_context>
chip_gen: v7x
topology: tpu7x:2x2x1
jax: 0.10.0
libtpu: 0.0.40
codegen_flags: <defaults>
</compile_context>

<pallas_src>
import math
import functools

import jax
import jax.numpy as jnp
from jax.experimental import pallas as pl
from jax.experimental.pallas import tpu as pltpu


def _selfatt_kernel(x_ref, wq_ref, bq_ref, wkv_ref, bkv_ref, wd_ref, bd_ref,
                    gamma_ref, beta_ref,
                    out_ref,
                    kv_scr, q_scr, acc_scr,
                    *, num_heads: int, head_dim: int, q_tile: int, eps: float,
                    cache_kv: bool):
    """One (batch, query-tile) grid step: attention + dense + residual + LayerNorm."""
    H = num_heads * head_dim
    cdt = kv_scr.dtype                      # MXU compute dtype (bf16 by default)
    qi = pl.program_id(1)
    scale = 1.0 / math.sqrt(head_dim)

    # ---- K/V projection, cached in VMEM across query tiles of a batch element ----
    def project_kv():
        xs = x_ref[0]                       # (S, H) full sequence, input dtype
        kv = jnp.dot(xs.astype(cdt), wkv_ref[...],
                     preferred_element_type=jnp.float32)                # (S, 2H) f32
        kv_scr[...] = (kv + bkv_ref[...]).astype(cdt)

    if cache_kv:
        @pl.when(qi == 0)                   # once per batch element
        def _():
            project_kv()
    else:
        project_kv()                        # B == 1: qi is "parallel", recompute

    # ---- query tile sliced out of the resident full-sequence block ----
    row0 = pl.multiple_of(qi * q_tile, q_tile)
    xq = x_ref[0, pl.ds(row0, q_tile), :]                               # (TQ, H)
    q = jnp.dot(xq.astype(cdt), wq_ref[...],
                preferred_element_type=jnp.float32)                     # (TQ, H) f32
    q_scr[...] = ((q + bq_ref[...]) * scale).astype(cdt)

    # f32 accumulator, pre-loaded with the dense bias + residual (layer input).
    acc_scr[...] = xq.astype(jnp.float32) + bd_ref[...]

    # ---- per-head attention; output projection folded into the loop ----
    for h in range(num_heads):
        lo = h * head_dim
        qh = q_scr[:, lo:lo + head_dim]                                 # (TQ, d)
        kh = kv_scr[:, lo:lo + head_dim]                                # (S, d)
        vh = kv_scr[:, H + lo:H + lo + head_dim]                        # (S, d)

        # contract on head_dim of both operands (no explicit k.T materialized)
        scores = jax.lax.dot_general(qh, kh, (((1,), (1,)), ((), ())),
                                     preferred_element_type=jnp.float32)  # (TQ, S)
        m = jnp.max(scores, axis=-1, keepdims=True)
        e = jnp.exp(scores - m)
        denom = jnp.sum(e, axis=-1, keepdims=True)
        probs = e * pl.reciprocal(denom, approx=True)                   # EUP reciprocal
        # attention-probs dropout: identity in eval mode
        ctx_h = jnp.dot(probs.astype(cdt), vh,
                        preferred_element_type=jnp.float32)             # (TQ, d) f32
        # dense output projection rows for this head, accumulated in f32 VMEM
        acc_scr[...] += jnp.dot(ctx_h.astype(cdt), wd_ref[lo:lo + head_dim, :],
                                preferred_element_type=jnp.float32)

    # ---- LayerNorm(dense(ctx) + input) ----
    hs = acc_scr[...]                                                   # (TQ, H) f32
    mean = jnp.mean(hs, axis=-1, keepdims=True)
    cen = hs - mean
    var = jnp.mean(cen * cen, axis=-1, keepdims=True)
    y = cen * jax.lax.rsqrt(var + eps)
    y = y * gamma_ref[...] + beta_ref[...]
    out_ref[0] = y.astype(out_ref.dtype)                                # lane-dense store


def selfatt_layer(x, params, *, num_heads: int, eps: float = 1e-12, q_tile=None,
                  compute_dtype=jnp.bfloat16,
                  vmem_limit_bytes: int = 64 * 1024 * 1024):
    """x: [B, S, H]. params hold PyTorch-layout ([out, in]) weights; transposed here."""
    B, S, H = x.shape
    assert H % num_heads == 0
    head_dim = H // num_heads

    if q_tile is None:
        for cand in (512, 256, 128):        # large tiles amortize per-step overhead
            if S % cand == 0:
                q_tile = cand
                break
        else:
            q_tile = S                      # ragged S: single tile spanning the sequence
    if S % q_tile != 0:
        raise ValueError(f"q_tile={q_tile} must divide S={S}")
    n_q = S // q_tile

    cdt = compute_dtype
    f32 = jnp.float32

    # Host-side weight prep: [out, in] -> [in, out]; fuse K/V; cast MXU operands to bf16.
    wq_t = jnp.asarray(params["wq"]).T.astype(cdt)                      # (H, H)
    wkv_t = jnp.concatenate([jnp.asarray(params["wk"]).T,
                             jnp.asarray(params["wv"]).T], axis=1).astype(cdt)  # (H, 2H)
    wd_t = jnp.asarray(params["wd"]).T.astype(cdt)                      # (H, H)
    bq = jnp.asarray(params["bq"], f32).reshape(1, H)
    bkv = jnp.concatenate([jnp.asarray(params["bk"], f32).reshape(1, H),
                           jnp.asarray(params["bv"], f32).reshape(1, H)], axis=1)
    bd = jnp.asarray(params["bd"], f32).reshape(1, H)
    gamma = jnp.asarray(params["gamma"], f32).reshape(1, H)
    beta = jnp.asarray(params["beta"], f32).reshape(1, H)

    # Cache K/V across query tiles (qi "arbitrary") unless that would leave a core
    # idle (B == 1 on a 2-TC chip): then keep qi "parallel" and recompute per tile.
    cache_kv = (B > 1) or (n_q == 1)
    qi_sem = "arbitrary" if cache_kv else "parallel"

    kernel = functools.partial(_selfatt_kernel,
                               num_heads=num_heads, head_dim=head_dim,
                               q_tile=q_tile, eps=eps, cache_kv=cache_kv)

    def const2d(shape):
        return pl.BlockSpec(shape, lambda b, qi: (0, 0))

    return pl.pallas_call(
        kernel,
        out_shape=jax.ShapeDtypeStruct((B, S, H), x.dtype),
        grid_spec=pltpu.PrefetchScalarGridSpec(
            num_scalar_prefetch=0,
            grid=(B, n_q),
            in_specs=[
                pl.BlockSpec((1, S, H), lambda b, qi: (b, 0, 0)),        # x (full seq, single stream)
                const2d((H, H)), const2d((1, H)),                        # Wq^T, bq
                const2d((H, 2 * H)), const2d((1, 2 * H)),                # [Wk|Wv]^T, [bk|bv]
                const2d((H, H)), const2d((1, H)),                        # Wd^T, bd
                const2d((1, H)), const2d((1, H)),                        # gamma, beta
            ],
            out_specs=pl.BlockSpec((1, q_tile, H), lambda b, qi: (b, qi, 0)),
            scratch_shapes=[
                pltpu.VMEM((S, 2 * H), cdt),        # cached K|V projection
                pltpu.VMEM((q_tile, H), cdt),       # scaled Q projection
                pltpu.VMEM((q_tile, H), jnp.float32),  # f32 output accumulator
            ],
        ),
        compiler_params=pltpu.CompilerParams(
            dimension_semantics=("parallel", qi_sem),
            vmem_limit_bytes=vmem_limit_bytes,
        ),
    )(x, wq_t, bq, wkv_t, bkv, wd_t, bd, gamma, beta)


def _reference(x, params, num_heads, eps=1e-12):
    """Pure-JAX reference mirroring the PyTorch forward (eval mode, f32)."""
    B, S, H = x.shape
    d = H // num_heads

    def lin(v, w, b):
        return v @ w.T + b[0]

    q = lin(x, params["wq"], params["bq"]).reshape(B, S, num_heads, d).transpose(0, 2, 1, 3)
    k = lin(x, params["wk"], params["bk"]).reshape(B, S, num_heads, d).transpose(0, 2, 1, 3)
    v = lin(x, params["wv"], params["bv"]).reshape(B, S, num_heads, d).transpose(0, 2, 1, 3)

    scores = jnp.einsum("bhqd,bhkd->bhqk", q, k) / math.sqrt(d)
    probs = jax.nn.softmax(scores, axis=-1)
    ctx = jnp.einsum("bhqk,bhkd->bhqd", probs, v).transpose(0, 2, 1, 3).reshape(B, S, H)

    hs = lin(ctx, params["wd"], params["bd"]) + x
    mean = hs.mean(-1, keepdims=True)
    var = ((hs - mean) ** 2).mean(-1, keepdims=True)
    return (hs - mean) / jnp.sqrt(var + eps) * params["gamma"][0] + params["beta"][0]


if __name__ == "__main__":
    B, S, H, NH = 2, 8, 32, 4

    key = jax.random.PRNGKey(0)
    keys = jax.random.split(key, 10)
    scale = 1.0 / math.sqrt(H)
    params = {
        "wq": jax.random.uniform(keys[0], (H, H), jnp.float32, -scale, scale),
        "bq": jax.random.uniform(keys[1], (1, H), jnp.float32, -scale, scale),
        "wk": jax.random.uniform(keys[2], (H, H), jnp.float32, -scale, scale),
        "bk": jax.random.uniform(keys[3], (1, H), jnp.float32, -scale, scale),
        "wv": jax.random.uniform(keys[4], (H, H), jnp.float32, -scale, scale),
        "bv": jax.random.uniform(keys[5], (1, H), jnp.float32, -scale, scale),
        "wd": jax.random.uniform(keys[6], (H, H), jnp.float32, -scale, scale),
        "bd": jax.random.uniform(keys[7], (1, H), jnp.float32, -scale, scale),
        "gamma": jnp.ones((1, H), jnp.float32),
        "beta": jnp.zeros((1, H), jnp.float32),
    }
    x = jax.random.normal(keys[8], (B, S, H), jnp.float32)
    ref = _reference(x, params, NH)

    # 1) f32 MXU operands: tight check (only approx-reciprocal softmax differs).
    out_f32 = jax.block_until_ready(
        selfatt_layer(x, params, num_heads=NH, compute_dtype=jnp.float32))
    assert out_f32.shape == (B, S, H)
    assert jnp.allclose(out_f32, ref, atol=5e-3, rtol=5e-3), "mismatch (f32 compute)"

    # 2) default bf16 MXU operands: looser tolerance for bf16 operand rounding.
    out_bf16 = jax.block_until_ready(selfatt_layer(x, params, num_heads=NH))
    assert jnp.allclose(out_bf16, ref, atol=5e-2, rtol=5e-2), "mismatch (bf16 compute)"

    # 3) query-tiled path with K/V cached across tiles (B=2, two q tiles per batch).
    x3 = jax.random.normal(keys[9], (2, 16, H), jnp.float32)
    ref3 = _reference(x3, params, NH)
    out3 = jax.block_until_ready(selfatt_layer(x3, params, num_heads=NH, q_tile=8))
    assert jnp.allclose(out3, ref3, atol=5e-2, rtol=5e-2), "mismatch (tiled, cached KV)"

    # 4) B == 1 path: qi stays "parallel" (K/V recomputed per tile, both cores busy).
    x1 = x3[:1]
    out1 = jax.block_until_ready(selfatt_layer(x1, params, num_heads=NH, q_tile=8))
    assert jnp.allclose(out1, ref3[:1], atol=5e-2, rtol=5e-2), "mismatch (B=1 parallel qi)"

    print("KERNEL_OK")
</pallas_src>

<mosaic_0001>
module attributes {stable_mosaic.version = 11 : i64} {
  func.func @_selfatt_kernel(%arg0: i32, %arg1: i32, %arg2: memref<1x8x32xf32, #tpu.memory_space<vmem>>, %arg3: memref<32x32xf32, #tpu.memory_space<vmem>>, %arg4: memref<1x32xf32, #tpu.memory_space<vmem>>, %arg5: memref<32x64xf32, #tpu.memory_space<vmem>>, %arg6: memref<1x64xf32, #tpu.memory_space<vmem>>, %arg7: memref<32x32xf32, #tpu.memory_space<vmem>>, %arg8: memref<1x32xf32, #tpu.memory_space<vmem>>, %arg9: memref<1x32xf32, #tpu.memory_space<vmem>>, %arg10: memref<1x32xf32, #tpu.memory_space<vmem>>, %arg11: memref<1x8x32xf32, #tpu.memory_space<vmem>>, %arg12: memref<8x64xf32, #tpu.memory_space<vmem>>, %arg13: memref<8x32xf32, #tpu.memory_space<vmem>>, %arg14: memref<8x32xf32, #tpu.memory_space<vmem>>) attributes {dimension_semantics = [#tpu.dimension_semantics<parallel>, #tpu.dimension_semantics<arbitrary>], iteration_bounds = array<i64: 2, 1>, scalar_prefetch = 0 : i64, scratch_operands = 3 : i64, tpu.core_type = #tpu.core_type<tc>, window_params = [{transform_indices = @transform_0, window_bounds = array<i64: 1, 8, 32>}, {pipeline_mode = #tpu.pipeline_mode<synchronous>, transform_indices = @transform_1, window_bounds = array<i64: 32, 32>}, {pipeline_mode = #tpu.pipeline_mode<synchronous>, transform_indices = @transform_2, window_bounds = array<i64: 1, 32>}, {pipeline_mode = #tpu.pipeline_mode<synchronous>, transform_indices = @transform_3, window_bounds = array<i64: 32, 64>}, {pipeline_mode = #tpu.pipeline_mode<synchronous>, transform_indices = @transform_4, window_bounds = array<i64: 1, 64>}, {pipeline_mode = #tpu.pipeline_mode<synchronous>, transform_indices = @transform_5, window_bounds = array<i64: 32, 32>}, {pipeline_mode = #tpu.pipeline_mode<synchronous>, transform_indices = @transform_6, window_bounds = array<i64: 1, 32>}, {pipeline_mode = #tpu.pipeline_mode<synchronous>, transform_indices = @transform_7, window_bounds = array<i64: 1, 32>}, {pipeline_mode = #tpu.pipeline_mode<synchronous>, transform_indices = @transform_8, window_bounds = array<i64: 1, 32>}, {transform_indices = @transform_9, window_bounds = array<i64: 1, 8, 32>}]} {
    %c0_i32 = arith.constant 0 : i32
    %0 = arith.cmpi eq, %arg1, %c0_i32 : i32
    %1 = arith.extui %0 : i1 to i32
    %c0_i32_0 = arith.constant 0 : i32
    %2 = arith.cmpi ne, %1, %c0_i32_0 : i32
    scf.if %2 {
      %c0_88 = arith.constant 0 : index
      %c0_89 = arith.constant 0 : index
      %c0_90 = arith.constant 0 : index
      %126 = vector.load %arg2[%c0_88, %c0_89, %c0_90] : memref<1x8x32xf32, #tpu.memory_space<vmem>>, vector<1x8x32xf32>
      %127 = vector.shape_cast %126 : vector<1x8x32xf32> to vector<8x32xf32>
      %c0_91 = arith.constant 0 : index
      %c0_92 = arith.constant 0 : index
      %128 = vector.load %arg5[%c0_91, %c0_92] : memref<32x64xf32, #tpu.memory_space<vmem>>, vector<32x64xf32>
      %cst_93 = arith.constant dense<0.000000e+00> : vector<8x64xf32>
      %129 = tpu.matmul %127, %128, %cst_93 {dimension_numbers = #tpu.dot_dimension_numbers<[1], [0], [0], [1], [0, 0, 1, 1], [], []>} : vector<8x32xf32>, vector<32x64xf32>, vector<8x64xf32> -> vector<8x64xf32>
      %c0_94 = arith.constant 0 : index
      %c0_95 = arith.constant 0 : index
      %130 = vector.load %arg6[%c0_94, %c0_95] : memref<1x64xf32, #tpu.memory_space<vmem>>, vector<1x64xf32>
      %131 = vector.broadcast %130 : vector<1x64xf32> to vector<8x64xf32>
      %132 = arith.addf %129, %131 : vector<8x64xf32>
      %c0_96 = arith.constant 0 : index
      %c0_97 = arith.constant 0 : index
      %133 = vector.load %arg12[%c0_96, %c0_97] : memref<8x64xf32, #tpu.memory_space<vmem>>, vector<8x64xf32>
      tpu.vector_store %arg12[%c0_96, %c0_97], %132 {strides = array<i32>} : memref<8x64xf32, #tpu.memory_space<vmem>>, vector<8x64xf32>,
    } else {
    }
    %c8_i32 = arith.constant 8 : i32
    %3 = arith.muli %arg1, %c8_i32 : i32
    %4 = tpu.assume_multiple %3, 8 : i32
    %c0 = arith.constant 0 : index
    %5 = arith.index_cast %4 : i32 to index
    %c0_1 = arith.constant 0 : index
    %6 = vector.load %arg2[%c0, %5, %c0_1] : memref<1x8x32xf32, #tpu.memory_space<vmem>>, vector<1x8x32xf32>
    %7 = vector.shape_cast %6 : vector<1x8x32xf32> to vector<8x32xf32>
    %c0_2 = arith.constant 0 : index
    %c0_3 = arith.constant 0 : index
    %8 = vector.load %arg3[%c0_2, %c0_3] : memref<32x32xf32, #tpu.memory_space<vmem>>, vector<32x32xf32>
    %cst = arith.constant dense<0.000000e+00> : vector<8x32xf32>
    %9 = tpu.matmul %7, %8, %cst {dimension_numbers = #tpu.dot_dimension_numbers<[1], [0], [0], [1], [0, 0, 1, 1], [], []>} : vector<8x32xf32>, vector<32x32xf32>, vector<8x32xf32> -> vector<8x32xf32>
    %c0_4 = arith.constant 0 : index
    %c0_5 = arith.constant 0 : index
    %10 = vector.load %arg4[%c0_4, %c0_5] : memref<1x32xf32, #tpu.memory_space<vmem>>, vector<1x32xf32>
    %11 = vector.broadcast %10 : vector<1x32xf32> to vector<8x32xf32>
    %12 = arith.addf %9, %11 : vector<8x32xf32>
    %cst_6 = arith.constant 0.353553385 : f32
    %13 = vector.broadcast %cst_6 : f32 to vector<8x32xf32>
    %14 = arith.mulf %12, %13 : vector<8x32xf32>
    %c0_7 = arith.constant 0 : index
    %c0_8 = arith.constant 0 : index
    %15 = vector.load %arg13[%c0_7, %c0_8] : memref<8x32xf32, #tpu.memory_space<vmem>>, vector<8x32xf32>
    tpu.vector_store %arg13[%c0_7, %c0_8], %14 {strides = array<i32>} : memref<8x32xf32, #tpu.memory_space<vmem>>, vector<8x32xf32>,
    %c0_9 = arith.constant 0 : index
    %c0_10 = arith.constant 0 : index
    %16 = vector.load %arg8[%c0_9, %c0_10] : memref<1x32xf32, #tpu.memory_space<vmem>>, vector<1x32xf32>
    %17 = vector.broadcast %16 : vector<1x32xf32> to vector<8x32xf32>
    %18 = arith.addf %7, %17 : vector<8x32xf32>
    %c0_11 = arith.constant 0 : index
    %c0_12 = arith.constant 0 : index
    %19 = vector.load %arg14[%c0_11, %c0_12] : memref<8x32xf32, #tpu.memory_space<vmem>>, vector<8x32xf32>
    tpu.vector_store %arg14[%c0_11, %c0_12], %18 {strides = array<i32>} : memref<8x32xf32, #tpu.memory_space<vmem>>, vector<8x32xf32>,
    %c0_13 = arith.constant 0 : index
    %c0_14 = arith.constant 0 : index
    %20 = vector.load %arg13[%c0_13, %c0_14] : memref<8x32xf32, #tpu.memory_space<vmem>>, vector<8x8xf32>
    %c0_15 = arith.constant 0 : index
    %c0_16 = arith.constant 0 : index
    %21 = vector.load %arg12[%c0_15, %c0_16] : memref<8x64xf32, #tpu.memory_space<vmem>>, vector<8x8xf32>
    %c0_17 = arith.constant 0 : index
    %c32 = arith.constant 32 : index
    %22 = vector.load %arg12[%c0_17, %c32] : memref<8x64xf32, #tpu.memory_space<vmem>>, vector<8x8xf32>
    %cst_18 = arith.constant dense<0.000000e+00> : vector<8x8xf32>
    %23 = tpu.matmul %20, %21, %cst_18 {dimension_numbers = #tpu.dot_dimension_numbers<[1], [1], [0], [0], [0, 0, 1, 0], [], []>} : vector<8x8xf32>, vector<8x8xf32>, vector<8x8xf32> -> vector<8x8xf32>
    %cst_19 = arith.constant dense<0xFF800000> : vector<8xf32>
    %24 = vector.multi_reduction <maximumf>, %23, %cst_19 [1] : vector<8x8xf32> to vector<8xf32>
    %25 = vector.shape_cast %24 : vector<8xf32> to vector<8x1xf32>
    %26 = vector.broadcast %25 : vector<8x1xf32> to vector<8x8xf32>
    %27 = arith.subf %23, %26 : vector<8x8xf32>
    %28 = math.exp %27 : vector<8x8xf32>
    %cst_20 = arith.constant dense<0.000000e+00> : vector<8xf32>
    %29 = vector.multi_reduction <add>, %28, %cst_20 [1] : vector<8x8xf32> to vector<8xf32>
    %30 = vector.shape_cast %29 : vector<8xf32> to vector<8x1xf32>
    %31 = tpu.reciprocal %30 {approx = true} : vector<8x1xf32> -> vector<8x1xf32>
    %32 = vector.broadcast %31 : vector<8x1xf32> to vector<8x8xf32>
    %33 = arith.mulf %28, %32 : vector<8x8xf32>
    %cst_21 = arith.constant dense<0.000000e+00> : vector<8x8xf32>
    %34 = tpu.matmul %33, %22, %cst_21 {dimension_numbers = #tpu.dot_dimension_numbers<[1], [0], [0], [1], [0, 0, 1, 1], [], []>} : vector<8x8xf32>, vector<8x8xf32>, vector<8x8xf32> -> vector<8x8xf32>
    %c0_22 = arith.constant 0 : index
    %c0_23 = arith.constant 0 : index
    %35 = vector.load %arg14[%c0_22, %c0_23] : memref<8x32xf32, #tpu.memory_space<vmem>>, vector<8x32xf32>
    %c0_24 = arith.constant 0 : index
    %c0_25 = arith.constant 0 : index
    %36 = vector.load %arg7[%c0_24, %c0_25] : memref<32x32xf32, #tpu.memory_space<vmem>>, vector<8x32xf32>
    %cst_26 = arith.constant dense<0.000000e+00> : vector<8x32xf32>
    %37 = tpu.matmul %34, %36, %cst_26 {dimension_numbers = #tpu.dot_dimension_numbers<[1], [0], [0], [1], [0, 0, 1, 1], [], []>} : vector<8x8xf32>, vector<8x32xf32>, vector<8x32xf32> -> vector<8x32xf32>
    %38 = arith.addf %35, %37 : vector<8x32xf32>
    %c0_27 = arith.constant 0 : index
    %c0_28 = arith.constant 0 : index
    %39 = vector.load %arg14[%c0_27, %c0_28] : memref<8x32xf32, #tpu.memory_space<vmem>>, vector<8x32xf32>
    tpu.vector_store %arg14[%c0_27, %c0_28], %38 {strides = array<i32>} : memref<8x32xf32, #tpu.memory_space<vmem>>, vector<8x32xf32>,
    %c0_29 = arith.constant 0 : index
    %c8 = arith.constant 8 : index
    %40 = vector.load %arg13[%c0_29, %c8] : memref<8x32xf32, #tpu.memory_space<vmem>>, vector<8x8xf32>
    %c0_30 = arith.constant 0 : index
    %c8_31 = arith.constant 8 : index
    %41 = vector.load %arg12[%c0_30, %c8_31] : memref<8x64xf32, #tpu.memory_space<vmem>>, vector<8x8xf32>
    %c0_32 = arith.constant 0 : index
    %c40 = arith.constant 40 : index
    %42 = vector.load %arg12[%c0_32, %c40] : memref<8x64xf32, #tpu.memory_space<vmem>>, vector<8x8xf32>
    %cst_33 = arith.constant dense<0.000000e+00> : vector<8x8xf32>
    %43 = tpu.matmul %40, %41, %cst_33 {dimension_numbers = #tpu.dot_dimension_numbers<[1], [1], [0], [0], [0, 0, 1, 0], [], []>} : vector<8x8xf32>, vector<8x8xf32>, vector<8x8xf32> -> vector<8x8xf32>
    %cst_34 = arith.constant dense<0xFF800000> : vector<8xf32>
    %44 = vector.multi_reduction <maximumf>, %43, %cst_34 [1] : vector<8x8xf32> to vector<8xf32>
    %45 = vector.shape_cast %44 : vector<8xf32> to vector<8x1xf32>
    %46 = vector.broadcast %45 : vector<8x1xf32> to vector<8x8xf32>
    %47 = arith.subf %43, %46 : vector<8x8xf32>
    %48 = math.exp %47 : vector<8x8xf32>
    %cst_35 = arith.constant dense<0.000000e+00> : vector<8xf32>
    %49 = vector.multi_reduction <add>, %48, %cst_35 [1] : vector<8x8xf32> to vector<8xf32>
    %50 = vector.shape_cast %49 : vector<8xf32> to vector<8x1xf32>
    %51 = tpu.reciprocal %50 {approx = true} : vector<8x1xf32> -> vector<8x1xf32>
    %52 = vector.broadcast %51 : vector<8x1xf32> to vector<8x8xf32>
    %53 = arith.mulf %48, %52 : vector<8x8xf32>
    %cst_36 = arith.constant dense<0.000000e+00> : vector<8x8xf32>
    %54 = tpu.matmul %53, %42, %cst_36 {dimension_numbers = #tpu.dot_dimension_numbers<[1], [0], [0], [1], [0, 0, 1, 1], [], []>} : vector<8x8xf32>, vector<8x8xf32>, vector<8x8xf32> -> vector<8x8xf32>
    %c0_37 = arith.constant 0 : index
    %c0_38 = arith.constant 0 : index
    %55 = vector.load %arg14[%c0_37, %c0_38] : memref<8x32xf32, #tpu.memory_space<vmem>>, vector<8x32xf32>
    %c8_39 = arith.constant 8 : index
    %c0_40 = arith.constant 0 : index
    %56 = vector.load %arg7[%c8_39, %c0_40] : memref<32x32xf32, #tpu.memory_space<vmem>>, vector<8x32xf32>
    %cst_41 = arith.constant dense<0.000000e+00> : vector<8x32xf32>
    %57 = tpu.matmul %54, %56, %cst_41 {dimension_numbers = #tpu.dot_dimension_numbers<[1], [0], [0], [1], [0, 0, 1, 1], [], []>} : vector<8x8xf32>, vector<8x32xf32>, vector<8x32xf32> -> vector<8x32xf32>
    %58 = arith.addf %55, %57 : vector<8x32xf32>
    %c0_42 = arith.constant 0 : index
    %c0_43 = arith.constant 0 : index
    %59 = vector.load %arg14[%c0_42, %c0_43] : memref<8x32xf32, #tpu.memory_space<vmem>>, vector<8x32xf32>
    tpu.vector_store %arg14[%c0_42, %c0_43], %58 {strides = array<i32>} : memref<8x32xf32, #tpu.memory_space<vmem>>, vector<8x32xf32>,
    %c0_44 = arith.constant 0 : index
    %c16 = arith.constant 16 : index
    %60 = vector.load %arg13[%c0_44, %c16] : memref<8x32xf32, #tpu.memory_space<vmem>>, vector<8x8xf32>
    %c0_45 = arith.constant 0 : index
    %c16_46 = arith.constant 16 : index
    %61 = vector.load %arg12[%c0_45, %c16_46] : memref<8x64xf32, #tpu.memory_space<vmem>>, vector<8x8xf32>
    %c0_47 = arith.constant 0 : index
    %c48 = arith.constant 48 : index
    %62 = vector.load %arg12[%c0_47, %c48] : memref<8x64xf32, #tpu.memory_space<vmem>>, vector<8x8xf32>
    %cst_48 = arith.constant dense<0.000000e+00> : vector<8x8xf32>
    %63 = tpu.matmul %60, %61, %cst_48 {dimension_numbers = #tpu.dot_dimension_numbers<[1], [1], [0], [0], [0, 0, 1, 0], [], []>} : vector<8x8xf32>, vector<8x8xf32>, vector<8x8xf32> -> vector<8x8xf32>
    %cst_49 = arith.constant dense<0xFF800000> : vector<8xf32>
    %64 = vector.multi_reduction <maximumf>, %63, %cst_49 [1] : vector<8x8xf32> to vector<8xf32>
    %65 = vector.shape_cast %64 : vector<8xf32> to vector<8x1xf32>
    %66 = vector.broadcast %65 : vector<8x1xf32> to vector<8x8xf32>
    %67 = arith.subf %63, %66 : vector<8x8xf32>
    %68 = math.exp %67 : vector<8x8xf32>
    %cst_50 = arith.constant dense<0.000000e+00> : vector<8xf32>
    %69 = vector.multi_reduction <add>, %68, %cst_50 [1] : vector<8x8xf32> to vector<8xf32>
    %70 = vector.shape_cast %69 : vector<8xf32> to vector<8x1xf32>
    %71 = tpu.reciprocal %70 {approx = true} : vector<8x1xf32> -> vector<8x1xf32>
    %72 = vector.broadcast %71 : vector<8x1xf32> to vector<8x8xf32>
    %73 = arith.mulf %68, %72 : vector<8x8xf32>
    %cst_51 = arith.constant dense<0.000000e+00> : vector<8x8xf32>
    %74 = tpu.matmul %73, %62, %cst_51 {dimension_numbers = #tpu.dot_dimension_numbers<[1], [0], [0], [1], [0, 0, 1, 1], [], []>} : vector<8x8xf32>, vector<8x8xf32>, vector<8x8xf32> -> vector<8x8xf32>
    %c0_52 = arith.constant 0 : index
    %c0_53 = arith.constant 0 : index
    %75 = vector.load %arg14[%c0_52, %c0_53] : memref<8x32xf32, #tpu.memory_space<vmem>>, vector<8x32xf32>
    %c16_54 = arith.constant 16 : index
    %c0_55 = arith.constant 0 : index
    %76 = vector.load %arg7[%c16_54, %c0_55] : memref<32x32xf32, #tpu.memory_space<vmem>>, vector<8x32xf32>
    %cst_56 = arith.constant dense<0.000000e+00> : vector<8x32xf32>
    %77 = tpu.matmul %74, %76, %cst_56 {dimension_numbers = #tpu.dot_dimension_numbers<[1], [0], [0], [1], [0, 0, 1, 1], [], []>} : vector<8x8xf32>, vector<8x32xf32>, vector<8x32xf32> -> vector<8x32xf32>
    %78 = arith.addf %75, %77 : vector<8x32xf32>
    %c0_57 = arith.constant 0 : index
    %c0_58 = arith.constant 0 : index
    %79 = vector.load %arg14[%c0_57, %c0_58] : memref<8x32xf32, #tpu.memory_space<vmem>>, vector<8x32xf32>
    tpu.vector_store %arg14[%c0_57, %c0_58], %78 {strides = array<i32>} : memref<8x32xf32, #tpu.memory_space<vmem>>, vector<8x32xf32>,
    %c0_59 = arith.constant 0 : index
    %c24 = arith.constant 24 : index
    %80 = vector.load %arg13[%c0_59, %c24] : memref<8x32xf32, #tpu.memory_space<vmem>>, vector<8x8xf32>
    %c0_60 = arith.constant 0 : index
    %c24_61 = arith.constant 24 : index
    %81 = vector.load %arg12[%c0_60, %c24_61] : memref<8x64xf32, #tpu.memory_space<vmem>>, vector<8x8xf32>
    %c0_62 = arith.constant 0 : index
    %c56 = arith.constant 56 : index
    %82 = vector.load %arg12[%c0_62, %c56] : memref<8x64xf32, #tpu.memory_space<vmem>>, vector<8x8xf32>
    %cst_63 = arith.constant dense<0.000000e+00> : vector<8x8xf32>
    %83 = tpu.matmul %80, %81, %cst_63 {dimension_numbers = #tpu.dot_dimension_numbers<[1], [1], [0], [0], [0, 0, 1, 0], [], []>} : vector<8x8xf32>, vector<8x8xf32>, vector<8x8xf32> -> vector<8x8xf32>
    %cst_64 = arith.constant dense<0xFF800000> : vector<8xf32>
    %84 = vector.multi_reduction <maximumf>, %83, %cst_64 [1] : vector<8x8xf32> to vector<8xf32>
    %85 = vector.shape_cast %84 : vector<8xf32> to vector<8x1xf32>
    %86 = vector.broadcast %85 : vector<8x1xf32> to vector<8x8xf32>
    %87 = arith.subf %83, %86 : vector<8x8xf32>
    %88 = math.exp %87 : vector<8x8xf32>
    %cst_65 = arith.constant dense<0.000000e+00> : vector<8xf32>
    %89 = vector.multi_reduction <add>, %88, %cst_65 [1] : vector<8x8xf32> to vector<8xf32>
    %90 = vector.shape_cast %89 : vector<8xf32> to vector<8x1xf32>
    %91 = tpu.reciprocal %90 {approx = true} : vector<8x1xf32> -> vector<8x1xf32>
    %92 = vector.broadcast %91 : vector<8x1xf32> to vector<8x8xf32>
    %93 = arith.mulf %88, %92 : vector<8x8xf32>
    %cst_66 = arith.constant dense<0.000000e+00> : vector<8x8xf32>
    %94 = tpu.matmul %93, %82, %cst_66 {dimension_numbers = #tpu.dot_dimension_numbers<[1], [0], [0], [1], [0, 0, 1, 1], [], []>} : vector<8x8xf32>, vector<8x8xf32>, vector<8x8xf32> -> vector<8x8xf32>
    %c0_67 = arith.constant 0 : index
    %c0_68 = arith.constant 0 : index
    %95 = vector.load %arg14[%c0_67, %c0_68] : memref<8x32xf32, #tpu.memory_space<vmem>>, vector<8x32xf32>
    %c24_69 = arith.constant 24 : index
    %c0_70 = arith.constant 0 : index
    %96 = vector.load %arg7[%c24_69, %c0_70] : memref<32x32xf32, #tpu.memory_space<vmem>>, vector<8x32xf32>
    %cst_71 = arith.constant dense<0.000000e+00> : vector<8x32xf32>
    %97 = tpu.matmul %94, %96, %cst_71 {dimension_numbers = #tpu.dot_dimension_numbers<[1], [0], [0], [1], [0, 0, 1, 1], [], []>} : vector<8x8xf32>, vector<8x32xf32>, vector<8x32xf32> -> vector<8x32xf32>
    %98 = arith.addf %95, %97 : vector<8x32xf32>
    %c0_72 = arith.constant 0 : index
    %c0_73 = arith.constant 0 : index
    %99 = vector.load %arg14[%c0_72, %c0_73] : memref<8x32xf32, #tpu.memory_space<vmem>>, vector<8x32xf32>
    tpu.vector_store %arg14[%c0_72, %c0_73], %98 {strides = array<i32>} : memref<8x32xf32, #tpu.memory_space<vmem>>, vector<8x32xf32>,
    %c0_74 = arith.constant 0 : index
    %c0_75 = arith.constant 0 : index
    %100 = vector.load %arg14[%c0_74, %c0_75] : memref<8x32xf32, #tpu.memory_space<vmem>>, vector<8x32xf32>
    %cst_76 = arith.constant dense<0.000000e+00> : vector<8xf32>
    %101 = vector.multi_reduction <add>, %100, %cst_76 [1] : vector<8x32xf32> to vector<8xf32>
    %102 = vector.shape_cast %101 : vector<8xf32> to vector<8x1xf32>
    %cst_77 = arith.constant 3.200000e+01 : f32
    %103 = vector.broadcast %cst_77 : f32 to vector<8x1xf32>
    %104 = arith.divf %102, %103 : vector<8x1xf32>
    %105 = vector.broadcast %104 : vector<8x1xf32> to vector<8x32xf32>
    %106 = arith.subf %100, %105 : vector<8x32xf32>
    %107 = arith.mulf %106, %106 : vector<8x32xf32>
    %cst_78 = arith.constant dense<0.000000e+00> : vector<8xf32>
    %108 = vector.multi_reduction <add>, %107, %cst_78 [1] : vector<8x32xf32> to vector<8xf32>
    %109 = vector.shape_cast %108 : vector<8xf32> to vector<8x1xf32>
    %cst_79 = arith.constant 3.200000e+01 : f32
    %110 = vector.broadcast %cst_79 : f32 to vector<8x1xf32>
    %111 = arith.divf %109, %110 : vector<8x1xf32>
    %cst_80 = arith.constant 9.99999996E-13 : f32
    %112 = vector.broadcast %cst_80 : f32 to vector<8x1xf32>
    %113 = arith.addf %111, %112 : vector<8x1xf32>
    %114 = math.rsqrt %113 : vector<8x1xf32>
    %115 = vector.broadcast %114 : vector<8x1xf32> to vector<8x32xf32>
    %116 = arith.mulf %106, %115 : vector<8x32xf32>
    %c0_81 = arith.constant 0 : index
    %c0_82 = arith.constant 0 : index
    %117 = vector.load %arg9[%c0_81, %c0_82] : memref<1x32xf32, #tpu.memory_space<vmem>>, vector<1x32xf32>
    %118 = vector.broadcast %117 : vector<1x32xf32> to vector<8x32xf32>
    %119 = arith.mulf %116, %118 : vector<8x32xf32>
    %c0_83 = arith.constant 0 : index
    %c0_84 = arith.constant 0 : index
    %120 = vector.load %arg10[%c0_83, %c0_84] : memref<1x32xf32, #tpu.memory_space<vmem>>, vector<1x32xf32>
    %121 = vector.broadcast %120 : vector<1x32xf32> to vector<8x32xf32>
    %122 = arith.addf %119, %121 : vector<8x32xf32>
    %c0_85 = arith.constant 0 : index
    %c0_86 = arith.constant 0 : index
    %c0_87 = arith.constant 0 : index
    %123 = vector.load %arg11[%c0_85, %c0_86, %c0_87] : memref<1x8x32xf32, #tpu.memory_space<vmem>>, vector<1x8x32xf32>
    %124 = vector.shape_cast %123 : vector<1x8x32xf32> to vector<8x32xf32>
    %125 = vector.shape_cast %122 : vector<8x32xf32> to vector<1x8x32xf32>
    tpu.vector_store %arg11[%c0_85, %c0_86, %c0_87], %125 {strides = array<i32>} : memref<1x8x32xf32, #tpu.memory_space<vmem>>, vector<1x8x32xf32>,
    return
  }
  func.func @transform_0(%arg0: i32, %arg1: i32) -> (i32, i32, i32) {
    %c0_i32 = arith.constant 0 : i32
    %c0_i32_0 = arith.constant 0 : i32
    %c0_i32_1 = arith.constant 0 : i32
    return %arg0, %c0_i32, %c0_i32_0 : i32, i32, i32
  }
  func.func @transform_1(%arg0: i32, %arg1: i32) -> (i32, i32) {
    %c0_i32 = arith.constant 0 : i32
    %c0_i32_0 = arith.constant 0 : i32
    %c0_i32_1 = arith.constant 0 : i32
    return %c0_i32, %c0_i32_0 : i32, i32
  }
  func.func @transform_2(%arg0: i32, %arg1: i32) -> (i32, i32) {
    %c0_i32 = arith.constant 0 : i32
    %c0_i32_0 = arith.constant 0 : i32
    %c0_i32_1 = arith.constant 0 : i32
    return %c0_i32, %c0_i32_0 : i32, i32
  }
  func.func @transform_3(%arg0: i32, %arg1: i32) -> (i32, i32) {
    %c0_i32 = arith.constant 0 : i32
    %c0_i32_0 = arith.constant 0 : i32
    %c0_i32_1 = arith.constant 0 : i32
    return %c0_i32, %c0_i32_0 : i32, i32
  }
  func.func @transform_4(%arg0: i32, %arg1: i32) -> (i32, i32) {
    %c0_i32 = arith.constant 0 : i32
    %c0_i32_0 = arith.constant 0 : i32
    %c0_i32_1 = arith.constant 0 : i32
    return %c0_i32, %c0_i32_0 : i32, i32
  }
  func.func @transform_5(%arg0: i32, %arg1: i32) -> (i32, i32) {
    %c0_i32 = arith.constant 0 : i32
    %c0_i32_0 = arith.constant 0 : i32
    %c0_i32_1 = arith.constant 0 : i32
    return %c0_i32, %c0_i32_0 : i32, i32
  }
  func.func @transform_6(%arg0: i32, %arg1: i32) -> (i32, i32) {
    %c0_i32 = arith.constant 0 : i32
    %c0_i32_0 = arith.constant 0 : i32
    %c0_i32_1 = arith.constant 0 : i32
    return %c0_i32, %c0_i32_0 : i32, i32
  }
  func.func @transform_7(%arg0: i32, %arg1: i32) -> (i32, i32) {
    %c0_i32 = arith.constant 0 : i32
    %c0_i32_0 = arith.constant 0 : i32
    %c0_i32_1 = arith.constant 0 : i32
    return %c0_i32, %c0_i32_0 : i32, i32
  }
  func.func @transform_8(%arg0: i32, %arg1: i32) -> (i32, i32) {
    %c0_i32 = arith.constant 0 : i32
    %c0_i32_0 = arith.constant 0 : i32
    %c0_i32_1 = arith.constant 0 : i32
    return %c0_i32, %c0_i32_0 : i32, i32
  }
  func.func @transform_9(%arg0: i32, %arg1: i32) -> (i32, i32, i32) {
    %c0_i32 = arith.constant 0 : i32
    %c0_i32_0 = arith.constant 0 : i32
    return %arg0, %arg1, %c0_i32 : i32, i32, i32
  }
}

</mosaic_0001>

<llo_original>
// kernel: tpu_custom_call.1
$region0: #{tpu_custom_call.1}
  #allocation0 [shape = 'u32[]', space=smem, size = 0x4, offset = 0x4, fixed_abs, tag = 'smem constant byte address 0x4 - core index']
  #allocation1 [shape = 'u32[144,128]{1,0:T(1,128)}', space=vmem, size = 0x12000, scoped, tag = 'internal scratch']
  #allocation2 [shape = 'f32[8,64]{1,0:T(8,128)}', space=vmem, size = 0x1000, scoped, tag = 'scratch operand']
  #allocation3 [shape = 'f32[8,32]{1,0:T(8,128)}', space=vmem, size = 0x1000, scoped, tag = 'scratch operand']
  #allocation4 [shape = 'f32[8,32]{1,0:T(8,128)}', space=vmem, size = 0x1000, scoped, tag = 'scratch operand']
  %s0 = inlined_call_operand.hbm [shape: f32[2,8,32], index: 0, kind: input, shape index: {}]
  %s1 = inlined_call_operand.hbm [shape: f32[32,32], index: 1, kind: input, shape index: {}]
  %s2 = inlined_call_operand.hbm [shape: f32[1,32], index: 2, kind: input, shape index: {}]
  %s3 = inlined_call_operand.hbm [shape: f32[32,64], index: 3, kind: input, shape index: {}]
  %s4 = inlined_call_operand.hbm [shape: f32[1,64], index: 4, kind: input, shape index: {}]
  %s5 = inlined_call_operand.hbm [shape: f32[32,32], index: 5, kind: input, shape index: {}]
  %s6 = inlined_call_operand.hbm [shape: f32[1,32], index: 6, kind: input, shape index: {}]
  %s7 = inlined_call_operand.hbm [shape: f32[1,32], index: 7, kind: input, shape index: {}]
  %s8 = inlined_call_operand.hbm [shape: f32[1,32], index: 8, kind: input, shape index: {}]
  %s9 = inlined_call_operand.hbm [shape: f32[2,8,32], index: 9, kind: output, shape index: {}]
  %s10 = sld [smem:[#allocation0]]
  $region109: #{tpu_custom_call.1} parent=0
    _
  %s12 = ssub.s32 1, %s10
  %s13 = scalar_select 0, %s12, %s10
  $region1: #{tpu_custom_call.1} parent=0
    #allocation5 [shape = 'u8[8192]{0}', space=vmem, size = 0x2000, scoped, tag = 'input window, operand 0']
    #allocation6 [shape = 's32[2]{0}', space=sflag, size = 0x8, scoped, tag = 'scoped memory for tpu_custom_call.1']
    #allocation7 [shape = 's32[2]{0}', space=sflag, size = 0x8, scoped, tag = 'scoped memory for tpu_custom_call.1']
    #allocation8 [shape = 'u8[16384]{0}', space=vmem, size = 0x4000, scoped, tag = 'input window, operand 1, single buffered']
    #allocation9 [shape = 's32[1]{0}', space=sflag, size = 0x4, scoped, tag = 'scoped memory for tpu_custom_call.1']
    #allocation10 [shape = 'u8[512]{0}', space=vmem, size = 0x400, scoped, tag = 'input window, operand 2, single buffered']
    #allocation11 [shape = 'u8[16384]{0}', space=vmem, size = 0x4000, scoped, tag = 'input window, operand 3, single buffered']
    #allocation12 [shape = 's32[1]{0}', space=sflag, size = 0x4, scoped, tag = 'scoped memory for tpu_custom_call.1']
    #allocation13 [shape = 'u8[512]{0}', space=vmem, size = 0x400, scoped, tag = 'input window, operand 4, single buffered']
    #allocation14 [shape = 'u8[16384]{0}', space=vmem, size = 0x4000, scoped, tag = 'input window, operand 5, single buffered']
    #allocation15 [shape = 's32[1]{0}', space=sflag, size = 0x4, scoped, tag = 'scoped memory for tpu_custom_call.1']
    #allocation16 [shape = 'u8[512]{0}', space=vmem, size = 0x400, scoped, tag = 'input window, operand 6, single buffered']
    #allocation17 [shape = 'u8[512]{0}', space=vmem, size = 0x400, scoped, tag = 'input window, operand 7, single buffered']
    #allocation18 [shape = 's32[1]{0}', space=sflag, size = 0x4, scoped, tag = 'scoped memory for tpu_custom_call.1']
    #allocation19 [shape = 'u8[512]{0}', space=vmem, size = 0x400, scoped, tag = 'input window, operand 8, single buffered']
    #allocation20 [shape = 'u8[8192]{0}', space=vmem, size = 0x2000, scoped, tag = 'output window, operand 0']
    %14 = vsyncpa [#allocation6], 0
    %s15 = scalar_lea.sflag [#allocation6], 1
    %16 = vsyncpa %s15, 0
    %17 = vsyncpa [#allocation9], 0
    %18 = vsyncpa [#allocation12], 0
    %19 = vsyncpa [#allocation15], 0
    %20 = vsyncpa [#allocation18], 0
    %21 = vsyncpa [#allocation7], 0
    %s22 = scalar_lea.sflag [#allocation7], 1
    %23 = vsyncpa %s22, 0
    loop: start=0, step=1, limit=4
    $region2: #{tpu_custom_call.1} parent=1 // loop_pre_header
      _
    $region3: #{tpu_custom_call.1} parent=1 // loop_header
      %s25 = sphi 0, %s29
      %p26 = scmp.ge.s32.totalorder %s25, 4
      %s32 = sphi 0, %s44
      %s33 = sphi 0, %s40
      %s34 = sphi 0, %s32
      %s35 = sphi 0, %s33
      %s36 = sphi 0, %s34
      %s37 = sphi 0, %s35
      %s47 = sphi 0, %s49
      %s50 = sphi 0, %s47
      %s51 = sphi 0, %s50
      %s67 = sphi 0, %s51
      %s71 = sphi 0, %s71
      %s73 = sphi 0, %s71
      %s74 = sphi 0, %s73
      %s88 = sphi 0, %s74
      %s92 = sphi 0, %s92
      %s94 = sphi 0, %s92
      %s95 = sphi 0, %s94
      %s109 = sphi 0, %s95
      %s113 = sphi 0, %s113
      %s115 = sphi 0, %s113
      %s116 = sphi 0, %s115
      %s130 = sphi 0, %s116
      %s134 = sphi 0, %s134
      %s136 = sphi 0, %s134
      %s137 = sphi 0, %s136
      %s151 = sphi 0, %s137
      %s155 = sphi 0, %s155
      %s157 = sphi 0, %s155
      %s158 = sphi 0, %s157
      %s172 = sphi 0, %s158
      %s176 = sphi 0, %s176
      %s178 = sphi 0, %s176
      %s179 = sphi 0, %s178
      %s193 = sphi 0, %s179
      %s197 = sphi 0, %s197
      %s199 = sphi 0, %s197
      %s200 = sphi 0, %s199
      %s214 = sphi 0, %s200
      %s218 = sphi 0, %s218
      %s220 = sphi 0, %s218
      %s221 = sphi 0, %s220
      %s235 = sphi 0, %s221
      %s243 = sphi 0, %s245
      %s246 = sphi 0, %s243
      %s247 = sphi 0, %s246
      %s263 = sphi 0, %s247
    $region4: #{tpu_custom_call.1} parent=1 // loop_header_branch
      %28 = sbr.rel (%p26) target = $region8
    $region5: #{tpu_custom_call.1} parent=1 // loop_body
      %s30 = ssub.s32 %s25, 1
      %s31 = ssub.s32 %s25, 2
      %s38 = sadd.s32 1, %s33
      %p39 = scmp.ge.s32.totalorder %s38, 1
      %s40 = scalar_select %p39, 0, %s38
      %s41 = sadd.s32 1, %s32
      %s42 = scalar_select %p39, %s41, %s32
      %p43 = scmp.ge.s32.totalorder %s42, 2
      %s44 = scalar_select %p43, 0, %s42
      %s45 = ssub.s32 %s32, %s44
      %p46 = scmp.eq.s32.totalorder %s45, 0
      %s48 = sadd.s32 %s47, 1
      %s49 = scalar_select %p46, %s47, %s48
      %p52 = pneg %p46
      %p53 = scmp.eq.s32.totalorder %s25, 1
      %p54 = por %p52, %p53
      %p55 = scmp.ne.s32.totalorder %s47, %s50
      %p56 = scmp.eq.s32.totalorder %s25, 0
      %p57 = por %p55, %p56
      %p58 = scmp.ne.s32.totalorder %s47, %s50
      %p59 = scmp.eq.s32.totalorder %s30, 1
      %p60 = por %p58, %p59
      %p61 = scmp.ne.s32.totalorder %s50, %s51
      %p62 = scmp.eq.s32.totalorder %s30, 0
      %p63 = por %p61, %p62
      %p64 = scmp.ne.s32.totalorder %s50, %s51
      %p65 = scmp.eq.s32.totalorder %s31, 1
      %p66 = por %p64, %p65
      %p68 = scmp.ne.s32.totalorder %s51, %s67
      %p69 = scmp.eq.s32.totalorder %s31, 0
      %p70 = por %p68, %p69
      %s72 = sadd.s32 %s71, 1
      %p75 = scmp.eq.s32.totalorder %s25, 1
      %p76 = scmp.ne.s32.totalorder %s71, %s73
      %p77 = scmp.eq.s32.totalorder %s25, 0
      %p78 = por %p76, %p77
      %p79 = scmp.ne.s32.totalorder %s71, %s73
      %p80 = scmp.eq.s32.totalorder %s30, 1
      %p81 = por %p79, %p80
      %p82 = scmp.ne.s32.totalorder %s73, %s74
      %p83 = scmp.eq.s32.totalorder %s30, 0
      %p84 = por %p82, %p83
      %p85 = scmp.ne.s32.totalorder %s73, %s74
      %p86 = scmp.eq.s32.totalorder %s31, 1
      %p87 = por %p85, %p86
      %p89 = scmp.ne.s32.totalorder %s74, %s88
      %p90 = scmp.eq.s32.totalorder %s31, 0
      %p91 = por %p89, %p90
      %s93 = sadd.s32 %s92, 1
      %p96 = scmp.eq.s32.totalorder %s25, 1
      %p97 = scmp.ne.s32.totalorder %s92, %s94
      %p98 = scmp.eq.s32.totalorder %s25, 0
      %p99 = por %p97, %p98
      %p100 = scmp.ne.s32.totalorder %s92, %s94
      %p101 = scmp.eq.s32.totalorder %s30, 1
      %p102 = por %p100, %p101
      %p103 = scmp.ne.s32.totalorder %s94, %s95
      %p104 = scmp.eq.s32.totalorder %s30, 0
      %p105 = por %p103, %p104
      %p106 = scmp.ne.s32.totalorder %s94, %s95
      %p107 = scmp.eq.s32.totalorder %s31, 1
      %p108 = por %p106, %p107
      %p110 = scmp.ne.s32.totalorder %s95, %s109
      %p111 = scmp.eq.s32.totalorder %s31, 0
      %p112 = por %p110, %p111
      %s114 = sadd.s32 %s113, 1
      %p117 = scmp.eq.s32.totalorder %s25, 1
      %p118 = scmp.ne.s32.totalorder %s113, %s115
      %p119 = scmp.eq.s32.totalorder %s25, 0
      %p120 = por %p118, %p119
      %p121 = scmp.ne.s32.totalorder %s113, %s115
      %p122 = scmp.eq.s32.totalorder %s30, 1
      %p123 = por %p121, %p122
      %p124 = scmp.ne.s32.totalorder %s115, %s116
      %p125 = scmp.eq.s32.totalorder %s30, 0
      %p126 = por %p124, %p125
      %p127 = scmp.ne.s32.totalorder %s115, %s116
      %p128 = scmp.eq.s32.totalorder %s31, 1
      %p129 = por %p127, %p128
      %p131 = scmp.ne.s32.totalorder %s116, %s130
      %p132 = scmp.eq.s32.totalorder %s31, 0
      %p133 = por %p131, %p132
      %s135 = sadd.s32 %s134, 1
      %p138 = scmp.eq.s32.totalorder %s25, 1
      %p139 = scmp.ne.s32.totalorder %s134, %s136
      %p140 = scmp.eq.s32.totalorder %s25, 0
      %p141 = por %p139, %p140
      %p142 = scmp.ne.s32.totalorder %s134, %s136
      %p143 = scmp.eq.s32.totalorder %s30, 1
      %p144 = por %p142, %p143
      %p145 = scmp.ne.s32.totalorder %s136, %s137
      %p146 = scmp.eq.s32.totalorder %s30, 0
      %p147 = por %p145, %p146
      %p148 = scmp.ne.s32.totalorder %s136, %s137
      %p149 = scmp.eq.s32.totalorder %s31, 1
      %p150 = por %p148, %p149
      %p152 = scmp.ne.s32.totalorder %s137, %s151
      %p153 = scmp.eq.s32.totalorder %s31, 0
      %p154 = por %p152, %p153
      %s156 = sadd.s32 %s155, 1
      %p159 = scmp.eq.s32.totalorder %s25, 1
      %p160 = scmp.ne.s32.totalorder %s155, %s157
      %p161 = scmp.eq.s32.totalorder %s25, 0
      %p162 = por %p160, %p161
      %p163 = scmp.ne.s32.totalorder %s155, %s157
      %p164 = scmp.eq.s32.totalorder %s30, 1
      %p165 = por %p163, %p164
      %p166 = scmp.ne.s32.totalorder %s157, %s158
      %p167 = scmp.eq.s32.totalorder %s30, 0
      %p168 = por %p166, %p167
      %p169 = scmp.ne.s32.totalorder %s157, %s158
      %p170 = scmp.eq.s32.totalorder %s31, 1
      %p171 = por %p169, %p170
      %p173 = scmp.ne.s32.totalorder %s158, %s172
      %p174 = scmp.eq.s32.totalorder %s31, 0
      %p175 = por %p173, %p174
      %s177 = sadd.s32 %s176, 1
      %p180 = scmp.eq.s32.totalorder %s25, 1
      %p181 = scmp.ne.s32.totalorder %s176, %s178
      %p182 = scmp.eq.s32.totalorder %s25, 0
      %p183 = por %p181, %p182
      %p184 = scmp.ne.s32.totalorder %s176, %s178
      %p185 = scmp.eq.s32.totalorder %s30, 1
      %p186 = por %p184, %p185
      %p187 = scmp.ne.s32.totalorder %s178, %s179
      %p188 = scmp.eq.s32.totalorder %s30, 0
      %p189 = por %p187, %p188
      %p190 = scmp.ne.s32.totalorder %s178, %s179
      %p191 = scmp.eq.s32.totalorder %s31, 1
      %p192 = por %p190, %p191
      %p194 = scmp.ne.s32.totalorder %s179, %s193
      %p195 = scmp.eq.s32.totalorder %s31, 0
      %p196 = por %p194, %p195
      %s198 = sadd.s32 %s197, 1
      %p201 = scmp.eq.s32.totalorder %s25, 1
      %p202 = scmp.ne.s32.totalorder %s197, %s199
      %p203 = scmp.eq.s32.totalorder %s25, 0
      %p204 = por %p202, %p203
      %p205 = scmp.ne.s32.totalorder %s197, %s199
      %p206 = scmp.eq.s32.totalorder %s30, 1
      %p207 = por %p205, %p206
      %p208 = scmp.ne.s32.totalorder %s199, %s200
      %p209 = scmp.eq.s32.totalorder %s30, 0
      %p210 = por %p208, %p209
      %p211 = scmp.ne.s32.totalorder %s199, %s200
      %p212 = scmp.eq.s32.totalorder %s31, 1
      %p213 = por %p211, %p212
      %p215 = scmp.ne.s32.totalorder %s200, %s214
      %p216 = scmp.eq.s32.totalorder %s31, 0
      %p217 = por %p215, %p216
      %s219 = sadd.s32 %s218, 1
      %p222 = scmp.eq.s32.totalorder %s25, 1
      %p223 = scmp.ne.s32.totalorder %s218, %s220
      %p224 = scmp.eq.s32.totalorder %s25, 0
      %p225 = por %p223, %p224
      %p226 = scmp.ne.s32.totalorder %s218, %s220
      %p227 = scmp.eq.s32.totalorder %s30, 1
      %p228 = por %p226, %p227
      %p229 = scmp.ne.s32.totalorder %s220, %s221
      %p230 = scmp.eq.s32.totalorder %s30, 0
      %p231 = por %p229, %p230
      %p232 = scmp.ne.s32.totalorder %s220, %s221
      %p233 = scmp.eq.s32.totalorder %s31, 1
      %p234 = por %p232, %p233
      %p236 = scmp.ne.s32.totalorder %s221, %s235
      %p237 = scmp.eq.s32.totalorder %s31, 0
      %p238 = por %p236, %p237
      %s239 = ssub.s32 %s32, %s44
      %s240 = ssub.s32 %s33, %s40
      %s241 = sor.u32 %s239, %s240
      %p242 = scmp.eq.s32.totalorder %s241, 0
      %s244 = sadd.s32 %s243, 1
      %s245 = scalar_select %p242, %s243, %s244
      %p248 = pneg %p242
      %p249 = scmp.eq.s32.totalorder %s25, 1
      %p250 = por %p248, %p249
      %p251 = scmp.ne.s32.totalorder %s243, %s246
      %p252 = scmp.eq.s32.totalorder %s25, 0
      %p253 = por %p251, %p252
      %p254 = scmp.ne.s32.totalorder %s243, %s246
      %p255 = scmp.eq.s32.totalorder %s30, 1
      %p256 = por %p254, %p255
      %p257 = scmp.ne.s32.totalorder %s246, %s247
      %p258 = scmp.eq.s32.totalorder %s30, 0
      %p259 = por %p257, %p258
      %p260 = scmp.ne.s32.totalorder %s246, %s247
      %p261 = scmp.eq.s32.totalorder %s31, 1
      %p262 = por %p260, %p261
      %p264 = scmp.ne.s32.totalorder %s247, %s263
      %p265 = scmp.eq.s32.totalorder %s31, 0
      %p266 = por %p264, %p265
      %p267 = scmp.le.s32.totalorder 1, %s25
      %p268 = scmp.lt.s32.totalorder %s25, 3
      %p269 = pnand %p267, %p268
      %p270 = pneg %p269
      // Predicated region
      $region9: #{tpu_custom_call.1} parent=5 // pred_check
        _
      $region10: #{tpu_custom_call.1} parent=5 // pred_check_branch
        %272 = sbr.rel (%p269) target = $region12
      $region11: #{tpu_custom_call.1} parent=5 // pred_region
        %s273 = ssub.s32 %s25, 1
        // Predicated region
        $region13: #{tpu_custom_call.1} parent=11 // pred_check
          %p274 = pneg %p84
        $region14: #{tpu_custom_call.1} parent=11 // pred_check_branch
          %276 = sbr.rel (%p274) target = $region16
        $region15: #{tpu_custom_call.1} parent=11 // pred_region
          %s278 = ssub.s32 512, 512
          %279 = vsyncadd [#allocation9], %s278
          %s280 = sshll.u32 [#allocation8], 4
          %s281 = int_to_ptr.vmem [resolvable:$true] %s280
          %286 = dma.hbm_to_vmem [thread:$0]  %s1, 512, %s281, [#allocation9], 128, 128, 8
        $region16: #{tpu_custom_call.1} parent=11 // pred_fallthru
          _
        // Predicated region
        $region17: #{tpu_custom_call.1} parent=11 // pred_check
          %p287 = pneg %p105
        $region18: #{tpu_custom_call.1} parent=11 // pred_check_branch
          %289 = sbr.rel (%p287) target = $region20
        $region19: #{tpu_custom_call.1} parent=11 // pred_region
          %s291 = ssub.s32 16, 16
          %292 = vsyncadd [#allocation9], %s291
          %s294 = sshll.u32 [#allocation10], 4
          %s295 = int_to_ptr.vmem [resolvable:$true] %s294
          %297 = dma.hbm_to_vmem [thread:$0]  %s2, 16, %s295, [#allocation9]
        $region20: #{tpu_custom_call.1} parent=11 // pred_fallthru
          _
        // Predicated region
        $region21: #{tpu_custom_call.1} parent=11 // pred_check
          %p298 = pneg %p126
        $region22: #{tpu_custom_call.1} parent=11 // pred_check_branch
          %300 = sbr.rel (%p298) target = $region24
        $region23: #{tpu_custom_call.1} parent=11 // pred_region
          %s302 = ssub.s32 512, 512
          %303 = vsyncadd [#allocation12], %s302
          %s304 = sshll.u32 [#allocation11], 4
          %s305 = int_to_ptr.vmem [resolvable:$true] %s304
          %310 = dma.hbm_to_vmem [thread:$0]  %s3, 512, %s305, [#allocation12], 128, 128, 8
        $region24: #{tpu_custom_call.1} parent=11 // pred_fallthru
          _
        // Predicated region
        $region25: #{tpu_custom_call.1} parent=11 // pred_check
          %p311 = pneg %p147
        $region26: #{tpu_custom_call.1} parent=11 // pred_check_branch
          %313 = sbr.rel (%p311) target = $region28
        $region27: #{tpu_custom_call.1} parent=11 // pred_region
          %s315 = ssub.s32 16, 16
          %316 = vsyncadd [#allocation12], %s315
          %s318 = sshll.u32 [#allocation13], 4
          %s319 = int_to_ptr.vmem [resolvable:$true] %s318
          %321 = dma.hbm_to_vmem [thread:$0]  %s4, 16, %s319, [#allocation12]
        $region28: #{tpu_custom_call.1} parent=11 // pred_fallthru
          _
        // Predicated region
        $region29: #{tpu_custom_call.1} parent=11 // pred_check
          %p322 = pneg %p168
        $region30: #{tpu_custom_call.1} parent=11 // pred_check_branch
          %324 = sbr.rel (%p322) target = $region32
        $region31: #{tpu_custom_call.1} parent=11 // pred_region
          %s326 = ssub.s32 512, 512
          %327 = vsyncadd [#allocation15], %s326
          %s328 = sshll.u32 [#allocation14], 4
          %s329 = int_to_ptr.vmem [resolvable:$true] %s328
          %334 = dma.hbm_to_vmem [thread:$0]  %s5, 512, %s329, [#allocation15], 128, 128, 8
        $region32: #{tpu_custom_call.1} parent=11 // pred_fallthru
          _
        // Predicated region
        $region33: #{tpu_custom_call.1} parent=11 // pred_check
          %p335 = pneg %p189
        $region34: #{tpu_custom_call.1} parent=11 // pred_check_branch
          %337 = sbr.rel (%p335) target = $region36
        $region35: #{tpu_custom_call.1} parent=11 // pred_region
          %s339 = ssub.s32 16, 16
          %340 = vsyncadd [#allocation15], %s339
          %s342 = sshll.u32 [#allocation16], 4
          %s343 = int_to_ptr.vmem [resolvable:$true] %s342
          %345 = dma.hbm_to_vmem [thread:$0]  %s6, 16, %s343, [#allocation15]
        $region36: #{tpu_custom_call.1} parent=11 // pred_fallthru
          _
        // Predicated region
        $region37: #{tpu_custom_call.1} parent=11 // pred_check
          %p346 = pneg %p210
        $region38: #{tpu_custom_call.1} parent=11 // pred_check_branch
          %348 = sbr.rel (%p346) target = $region40
        $region39: #{tpu_custom_call.1} parent=11 // pred_region
          %s350 = ssub.s32 16, 16
          %351 = vsyncadd [#allocation18], %s350
          %s353 = sshll.u32 [#allocation17], 4
          %s354 = int_to_ptr.vmem [resolvable:$true] %s353
          %356 = dma.hbm_to_vmem [thread:$0]  %s7, 16, %s354, [#allocation18]
        $region40: #{tpu_custom_call.1} parent=11 // pred_fallthru
          _
        // Predicated region
        $region41: #{tpu_custom_call.1} parent=11 // pred_check
          %p357 = pneg %p231
        $region42: #{tpu_custom_call.1} parent=11 // pred_check_branch
          %359 = sbr.rel (%p357) target = $region44
        $region43: #{tpu_custom_call.1} parent=11 // pred_region
          %s361 = ssub.s32 16, 16
          %362 = vsyncadd [#allocation18], %s361
          %s364 = sshll.u32 [#allocation19], 4
          %s365 = int_to_ptr.vmem [resolvable:$true] %s364
          %367 = dma.hbm_to_vmem [thread:$0]  %s8, 16, %s365, [#allocation18]
        $region44: #{tpu_custom_call.1} parent=11 // pred_fallthru
          _
      $region12: #{tpu_custom_call.1} parent=5 // pred_fallthru
        _
      %p368 = scmp.lt.s32.totalorder %s25, 2
      // Predicated region
      $region45: #{tpu_custom_call.1} parent=5 // pred_check
        %p369 = pneg %p368
      $region46: #{tpu_custom_call.1} parent=5 // pred_check_branch
        %371 = sbr.rel (%p369) target = $region48
      $region47: #{tpu_custom_call.1} parent=5 // pred_region
        // Predicated region
        $region49: #{tpu_custom_call.1} parent=47 // pred_check
          %p372 = pneg %p57
        $region50: #{tpu_custom_call.1} parent=47 // pred_check_branch
          %374 = sbr.rel (%p372) target = $region52
        $region51: #{tpu_custom_call.1} parent=47 // pred_region
          %s375 = sand.u32 %s47, 1
          %s376 = scalar_lea.sflag [#allocation6], %s375
          %s377 = sand.u32 %s47, 1
          %s378 = smul.addr %s377, 8
          %s379 = scalar_lea.vmem [#allocation5], %s378
          %s381 = ssub.s32 128, 128
          %382 = vsyncadd %s376, %s381
          %s383 = smul.addr %s32, 128
          %s384 = scalar_lea.hbm %s0, %s383
          %s386 = sshll.u32 %s379, 4
          %s387 = int_to_ptr.vmem [resolvable:$true] %s386
          %389 = dma.hbm_to_vmem [thread:$0]  %s384, 128, %s387, %s376
        $region52: #{tpu_custom_call.1} parent=47 // pred_fallthru
          _
      $region48: #{tpu_custom_call.1} parent=5 // pred_fallthru
        _
      %p390 = scmp.le.s32.totalorder 1, %s25
      %p391 = scmp.lt.s32.totalorder %s25, 3
      %p392 = pnand %p390, %p391
      %p393 = pneg %p392
      // Predicated region
      $region53: #{tpu_custom_call.1} parent=5 // pred_check
        _
      $region54: #{tpu_custom_call.1} parent=5 // pred_check_branch
        %395 = sbr.rel (%p392) target = $region56
      $region55: #{tpu_custom_call.1} parent=5 // pred_region
        %s396 = ssub.s32 %s25, 1
        %s397 = sand.u32 %s50, 1
        %s398 = scalar_lea.sflag [#allocation6], %s397
        %s399 = sand.u32 %s50, 1
        %s400 = smul.addr %s399, 8
        %s401 = scalar_lea.vmem [#allocation5], %s400
        // Predicated region
        $region57: #{tpu_custom_call.1} parent=55 // pred_check
          %p402 = pneg %p63
        $region58: #{tpu_custom_call.1} parent=55 // pred_check_branch
          %404 = sbr.rel (%p402) target = $region60
        $region59: #{tpu_custom_call.1} parent=55 // pred_region
          %405 = dma.done %s398, 128
        $region60: #{tpu_custom_call.1} parent=55 // pred_fallthru
          _
        // Predicated region
        $region61: #{tpu_custom_call.1} parent=55 // pred_check
          %p406 = pneg %p84
        $region62: #{tpu_custom_call.1} parent=55 // pred_check_branch
          %408 = sbr.rel (%p406) target = $region64
        $region63: #{tpu_custom_call.1} parent=55 // pred_region
          %409 = dma.done [#allocation9], 512
        $region64: #{tpu_custom_call.1} parent=55 // pred_fallthru
          _
        // Predicated region
        $region65: #{tpu_custom_call.1} parent=55 // pred_check
          %p410 = pneg %p105
        $region66: #{tpu_custom_call.1} parent=55 // pred_check_branch
          %412 = sbr.rel (%p410) target = $region68
        $region67: #{tpu_custom_call.1} parent=55 // pred_region
          %413 = dma.done [#allocation9], 16
        $region68: #{tpu_custom_call.1} parent=55 // pred_fallthru
          _
        // Predicated region
        $region69: #{tpu_custom_call.1} parent=55 // pred_check
          %p414 = pneg %p126
        $region70: #{tpu_custom_call.1} parent=55 // pred_check_branch
          %416 = sbr.rel (%p414) target = $region72
        $region71: #{tpu_custom_call.1} parent=55 // pred_region
          %417 = dma.done [#allocation12], 512
        $region72: #{tpu_custom_call.1} parent=55 // pred_fallthru
          _
        // Predicated region
        $region73: #{tpu_custom_call.1} parent=55 // pred_check
          %p418 = pneg %p147
        $region74: #{tpu_custom_call.1} parent=55 // pred_check_branch
          %420 = sbr.rel (%p418) target = $region76
        $region75: #{tpu_custom_call.1} parent=55 // pred_region
          %421 = dma.done [#allocation12], 16
        $region76: #{tpu_custom_call.1} parent=55 // pred_fallthru
          _
        // Predicated region
        $region77: #{tpu_custom_call.1} parent=55 // pred_check
          %p422 = pneg %p168
        $region78: #{tpu_custom_call.1} parent=55 // pred_check_branch
          %424 = sbr.rel (%p422) target = $region80
        $region79: #{tpu_custom_call.1} parent=55 // pred_region
          %425 = dma.done [#allocation15], 512
        $region80: #{tpu_custom_call.1} parent=55 // pred_fallthru
          _
        // Predicated region
        $region81: #{tpu_custom_call.1} parent=55 // pred_check
          %p426 = pneg %p189
        $region82: #{tpu_custom_call.1} parent=55 // pred_check_branch
          %428 = sbr.rel (%p426) target = $region84
        $region83: #{tpu_custom_call.1} parent=55 // pred_region
          %429 = dma.done [#allocation15], 16
        $region84: #{tpu_custom_call.1} parent=55 // pred_fallthru
          _
        // Predicated region
        $region85: #{tpu_custom_call.1} parent=55 // pred_check
          %p430 = pneg %p210
        $region86: #{tpu_custom_call.1} parent=55 // pred_check_branch
          %432 = sbr.rel (%p430) target = $region88
        $region87: #{tpu_custom_call.1} parent=55 // pred_region
          %433 = dma.done [#allocation18], 16
        $region88: #{tpu_custom_call.1} parent=55 // pred_fallthru
          _
        // Predicated region
        $region89: #{tpu_custom_call.1} parent=55 // pred_check
          %p434 = pneg %p231
        $region90: #{tpu_custom_call.1} parent=55 // pred_check_branch
          %436 = sbr.rel (%p434) target = $region92
        $region91: #{tpu_custom_call.1} parent=55 // pred_region
          %437 = dma.done [#allocation18], 16
        $region92: #{tpu_custom_call.1} parent=55 // pred_fallthru
          _
        %s438 = sand.u32 %s50, 1
        %s439 = scalar_lea.sflag [#allocation6], %s438
        %s440 = sand.u32 %s50, 1
        %s441 = smul.addr %s440, 8
        %s442 = scalar_lea.vmem [#allocation5], %s441
        %p443 = pneg %p63
        %p444 = pneg %p60
        %p445 = pneg %p84
        %p446 = pneg %p81
        %p447 = pneg %p105
        %p448 = pneg %p102
        %p449 = pneg %p126
        %p450 = pneg %p123
        %p451 = pneg %p147
        %p452 = pneg %p144
        %p453 = pneg %p168
        %p454 = pneg %p165
        %p455 = pneg %p189
        %p456 = pneg %p186
        %p457 = pneg %p210
        %p458 = pneg %p207
        %p459 = pneg %p231
        %p460 = pneg %p228
        %p461 = pneg %p259
        %p462 = pneg %p256
        %s463 = sand.u32 %s246, 1
        %s464 = scalar_lea.sflag [#allocation7], %s463
        %s465 = sand.u32 %s246, 1
        %s466 = smul.addr %s465, 8
        %s467 = scalar_lea.vmem [#allocation20], %s466
        %p468 = scmp.eq.s32.totalorder %s35, 0
        // Predicated region
        $region93: #{tpu_custom_call.1} parent=55 // pred_check
          %p469 = pneg %p468
        $region94: #{tpu_custom_call.1} parent=55 // pred_check_branch
          %471 = sbr.rel (%p469) target = $region96
        $region95: #{tpu_custom_call.1} parent=55 // pred_region
          %v472 = vld [vmem:[%s401] sm:$0xff]
          %v473 = vld [vmem:[#allocation11] sm:$0xff]
          %v474 = vld [vmem:[#allocation11 + $0x8] sm:$0xff]
          %v475 = vld [vmem:[#allocation11 + $0x10] sm:$0xff]
          %v476 = vld [vmem:[#allocation11 + $0x18] sm:$0xff]
          %v477 = vld [vmem:[#allocation13] sm:$0x1]
          %v479 = vlaneseq
          %v480 = vshrl.u32 %v479, 7
          %v481 = vsub.s32 0, %v480
          %v482 = vrot.slane %v477, %v481
          %vm484 = vcmask 261120
          %v486 = vsel %vm484, %v472, 0
          %488 = vmatprep.subr.mxu0 0.0
          %489 = vmatpush1.msra.mxu0 %v473
          %490 = vmatprep.subr.mxu0 0.0
          %491 = vmatpush1.msra.mxu0 %v474
          %492 = vmatprep.subr.mxu0 0.0
          %493 = vmatpush1.msra.mxu0 %v475
          %494 = vmatprep.subr.mxu0 0.0
          %495 = vmatpush1.msra.mxu0 %v476
          %496 = vmatprep.subr.mxu0 0.0
          %497 = vmatpush1.msra.mxu0 0.0
          %498 = vmatprep.subr.mxu0 0.0
          %499 = vmatpush1.msra.mxu0 0.0
          %500 = vmatprep.subr.mxu0 0.0
          %501 = vmatpush1.msra.mxu0 0.0
          %502 = vmatprep.subr.mxu0 0.0
          %503 = vmatpush1.msra.mxu0 0.0
          %504 = vmatprep.subr.mxu0 0.0
          %505 = vmatpush1.msra.mxu0 0.0
          %506 = vmatprep.subr.mxu0 0.0
          %507 = vmatpush1.msra.mxu0 0.0
          %508 = vmatprep.subr.mxu0 0.0
          %509 = vmatpush1.msra.mxu0 0.0
          %510 = vmatprep.subr.mxu0 0.0
          %511 = vmatpush1.msra.mxu0 0.0
          %512 = vmatprep.subr.mxu0 0.0
          %513 = vmatpush1.msra.mxu0 0.0
          %514 = vmatprep.subr.mxu0 0.0
          %515 = vmatpush1.msra.mxu0 0.0
          %516 = vmatprep.subr.mxu0 0.0
          %517 = vmatpush1.msra.mxu0 0.0
          %518 = vmatprep.subr.mxu0 0.0
          %519 = vmatpush1.msra.mxu0 0.0
          %520 = vmatprep.subr.mxu0 0.0
          %521 = vmatpush1.msra.mxu0 0.0
          %522 = vmatprep.subr.mxu0 0.0
          %523 = vmatpush1.msra.mxu0 0.0
          %524 = vmatprep.subr.mxu0 0.0
          %525 = vmatpush1.msra.mxu0 0.0
          %526 = vmatprep.subr.mxu0 0.0
          %527 = vmatpush1.msra.mxu0 0.0
          %528 = vmatprep.subr.mxu0 0.0
          %529 = vmatpush1.msra.mxu0 0.0
          %530 = vmatprep.subr.mxu0 0.0
          %531 = vmatpush1.msra.mxu0 0.0
          %532 = vmatprep.subr.mxu0 0.0
          %533 = vmatpush1.msra.mxu0 0.0
          %534 = vmatprep.subr.mxu0 0.0
          %535 = vmatpush1.msra.mxu0 0.0
          %536 = vmatprep.subr.mxu0 0.0
          %537 = vmatpush1.msra.mxu0 0.0
          %538 = vmatprep.subr.mxu0 0.0
          %539 = vmatpush1.msra.mxu0 0.0
          %540 = vmatprep.subr.mxu0 0.0
          %541 = vmatpush1.msra.mxu0 0.0
          %542 = vmatprep.subr.mxu0 0.0
          %543 = vmatpush1.msra.mxu0 0.0
          %544 = vmatprep.subr.mxu0 0.0
          %545 = vmatpush1.msra.mxu0 0.0
          %546 = vmatprep.subr.mxu0 0.0
          %547 = vmatpush1.msra.mxu0 0.0
          %548 = vmatprep.subr.mxu0 0.0
          %549 = vmatpush1.msra.mxu0 0.0
          %550 = vmatprep.subr.mxu0 0.0
          %551 = vmatpush1.msra.mxu0 0.0
          %552 = vmatprep.mubr.f32.mxu0 0.0
          %553 = vmatmul.mubr.f32.gmra.mrb[0].mxu0 %v486
          %v554 = vpop.f32.mrb[0].mxu0
          %v555 = vadd.f32 %v482, %v554
          %v556 = vpop.f32.mrb[0].mxu0
          %557 = vdwg.mxu0
          %vm558 = vcmask 523264
          %559 = vst.msk [vmem:[#allocation2] sm:$0xff] %vm558, %v555
        $region96: #{tpu_custom_call.1} parent=55 // pred_fallthru
          _
        %s560 = smul.u32 %s35, 8
        %s561 = scalar_lea.vmem %s401, %s560 [#allocation5]
        %v562 = vld [vmem:[%s561] sm:$0xff]
        %v563 = vld [vmem:[#allocation8] sm:$0xff]
        %v564 = vld [vmem:[#allocation8 + $0x8] sm:$0xff]
        %v565 = vld [vmem:[#allocation8 + $0x10] sm:$0xff]
        %v566 = vld [vmem:[#allocation8 + $0x18] sm:$0xff]
        %v567 = vld [vmem:[#allocation10] sm:$0x1]
        %v569 = vlaneseq
        %v570 = vshrl.u32 %v569, 7
        %v571 = vsub.s32 0, %v570
        %v572 = vrot.slane %v567, %v571
        %vm574 = vcmask 261120
        %v576 = vsel %vm574, %v562, 0
        %578 = vmatprep.subr.mxu0 0.0
        %579 = vmatpush1.msra.mxu0 %v563
        %580 = vmatprep.subr.mxu0 0.0
        %581 = vmatpush1.msra.mxu0 %v564
        %582 = vmatprep.subr.mxu0 0.0
        %583 = vmatpush1.msra.mxu0 %v565
        %584 = vmatprep.subr.mxu0 0.0
        %585 = vmatpush1.msra.mxu0 %v566
        %586 = vmatprep.subr.mxu0 0.0
        %587 = vmatpush1.msra.mxu0 0.0
        %588 = vmatprep.subr.mxu0 0.0
        %589 = vmatpush1.msra.mxu0 0.0
        %590 = vmatprep.subr.mxu0 0.0
        %591 = vmatpush1.msra.mxu0 0.0
        %592 = vmatprep.subr.mxu0 0.0
        %593 = vmatpush1.msra.mxu0 0.0
        %594 = vmatprep.subr.mxu0 0.0
        %595 = vmatpush1.msra.mxu0 0.0
        %596 = vmatprep.subr.mxu0 0.0
        %597 = vmatpush1.msra.mxu0 0.0
        %598 = vmatprep.subr.mxu0 0.0
        %599 = vmatpush1.msra.mxu0 0.0
        %600 = vmatprep.subr.mxu0 0.0
        %601 = vmatpush1.msra.mxu0 0.0
        %602 = vmatprep.subr.mxu0 0.0
        %603 = vmatpush1.msra.mxu0 0.0
        %604 = vmatprep.subr.mxu0 0.0
        %605 = vmatpush1.msra.mxu0 0.0
        %606 = vmatprep.subr.mxu0 0.0
        %607 = vmatpush1.msra.mxu0 0.0
        %608 = vmatprep.subr.mxu0 0.0
        %609 = vmatpush1.msra.mxu0 0.0
        %610 = vmatprep.subr.mxu0 0.0
        %611 = vmatpush1.msra.mxu0 0.0
        %612 = vmatprep.subr.mxu0 0.0
        %613 = vmatpush1.msra.mxu0 0.0
        %614 = vmatprep.subr.mxu0 0.0
        %615 = vmatpush1.msra.mxu0 0.0
        %616 = vmatprep.subr.mxu0 0.0
        %617 = vmatpush1.msra.mxu0 0.0
        %618 = vmatprep.subr.mxu0 0.0
        %619 = vmatpush1.msra.mxu0 0.0
        %620 = vmatprep.subr.mxu0 0.0
        %621 = vmatpush1.msra.mxu0 0.0
        %622 = vmatprep.subr.mxu0 0.0
        %623 = vmatpush1.msra.mxu0 0.0
        %624 = vmatprep.subr.mxu0 0.0
        %625 = vmatpush1.msra.mxu0 0.0
        %626 = vmatprep.subr.mxu0 0.0
        %627 = vmatpush1.msra.mxu0 0.0
        %628 = vmatprep.subr.mxu0 0.0
        %629 = vmatpush1.msra.mxu0 0.0
        %630 = vmatprep.subr.mxu0 0.0
        %631 = vmatpush1.msra.mxu0 0.0
        %632 = vmatprep.subr.mxu0 0.0
        %633 = vmatpush1.msra.mxu0 0.0
        %634 = vmatprep.subr.mxu0 0.0
        %635 = vmatpush1.msra.mxu0 0.0
        %636 = vmatprep.subr.mxu0 0.0
        %637 = vmatpush1.msra.mxu0 0.0
        %638 = vmatprep.subr.mxu0 0.0
        %639 = vmatpush1.msra.mxu0 0.0
        %640 = vmatprep.subr.mxu0 0.0
        %641 = vmatpush1.msra.mxu0 0.0
        %642 = vmatprep.mubr.f32.mxu0 0.0
        %643 = vmatmul.mubr.f32.gmra.mrb[0].mxu0 %v576
        %v644 = vpop.f32.mrb[0].mxu0
        %v645 = vadd.f32 %v572, %v644
        %v646 = vpop.f32.mrb[0].mxu0
        %647 = vdwg.mxu0
        %v648 = vmul.f32 %v645, 0.35355338
        %649 = vst.msk [vmem:[#allocation3] sm:$0xff] %vm574, %v648
        %v650 = vld [vmem:[#allocation16] sm:$0x1]
        %v652 = vlaneseq
        %v653 = vshrl.u32 %v652, 7
        %v654 = vsub.s32 0, %v653
        %v655 = vrot.slane %v650, %v654
        %v657 = vadd.f32 %v562, %v655
        %658 = vst.msk [vmem:[#allocation4] sm:$0xff] %vm574, %v657
        %v659 = vld [vmem:[#allocation3] sm:$0xff]
        %v660 = vld [vmem:[#allocation2] sm:$0xff]
        %vm661 = vcmask 64512
        %v663 = vsel %vm661, %v659, 0
        %v666 = vsel %vm661, %v660, 0
        %668 = vmatprep.subr.mxu0 0.0
        %669 = vmatpush1.xpose.msra.mxu0 %v666
        %670 = vmatprep.subr.mxu0 0.0
        %671 = vmatpush1.xpose.msra.mxu0 0.0
        %672 = vmatprep.subr.mxu0 0.0
        %673 = vmatpush1.xpose.msra.mxu0 0.0
        %674 = vmatprep.subr.mxu0 0.0
        %675 = vmatpush1.xpose.msra.mxu0 0.0
        %676 = vmatprep.subr.mxu0 0.0
        %677 = vmatpush1.xpose.msra.mxu0 0.0
        %678 = vmatprep.subr.mxu0 0.0
        %679 = vmatpush1.xpose.msra.mxu0 0.0
        %680 = vmatprep.subr.mxu0 0.0
        %681 = vmatpush1.xpose.msra.mxu0 0.0
        %682 = vmatprep.subr.mxu0 0.0
        %683 = vmatpush1.xpose.msra.mxu0 0.0
        %684 = vmatprep.subr.mxu0 0.0
        %685 = vmatpush1.xpose.msra.mxu0 0.0
        %686 = vmatprep.subr.mxu0 0.0
        %687 = vmatpush1.xpose.msra.mxu0 0.0
        %688 = vmatprep.subr.mxu0 0.0
        %689 = vmatpush1.xpose.msra.mxu0 0.0
        %690 = vmatprep.subr.mxu0 0.0
        %691 = vmatpush1.xpose.msra.mxu0 0.0
        %692 = vmatprep.subr.mxu0 0.0
        %693 = vmatpush1.xpose.msra.mxu0 0.0
        %694 = vmatprep.subr.mxu0 0.0
        %695 = vmatpush1.xpose.msra.mxu0 0.0
        %696 = vmatprep.subr.mxu0 0.0
        %697 = vmatpush1.xpose.msra.mxu0 0.0
        %698 = vmatprep.subr.mxu0 0.0
        %699 = vmatpush1.xpose.msra.mxu0 0.0
        %700 = vmatprep.subr.mxu0 0.0
        %701 = vmatpush1.xpose.msra.mxu0 0.0
        %702 = vmatprep.subr.mxu0 0.0
        %703 = vmatpush1.xpose.msra.mxu0 0.0
        %704 = vmatprep.subr.mxu0 0.0
        %705 = vmatpush1.xpose.msra.mxu0 0.0
        %706 = vmatprep.subr.mxu0 0.0
        %707 = vmatpush1.xpose.msra.mxu0 0.0
        %708 = vmatprep.subr.mxu0 0.0
        %709 = vmatpush1.xpose.msra.mxu0 0.0
        %710 = vmatprep.subr.mxu0 0.0
        %711 = vmatpush1.xpose.msra.mxu0 0.0
        %712 = vmatprep.subr.mxu0 0.0
        %713 = vmatpush1.xpose.msra.mxu0 0.0
        %714 = vmatprep.subr.mxu0 0.0
        %715 = vmatpush1.xpose.msra.mxu0 0.0
        %716 = vmatprep.subr.mxu0 0.0
        %717 = vmatpush1.xpose.msra.mxu0 0.0
        %718 = vmatprep.subr.mxu0 0.0
        %719 = vmatpush1.xpose.msra.mxu0 0.0
        %720 = vmatprep.subr.mxu0 0.0
        %721 = vmatpush1.xpose.msra.mxu0 0.0
        %722 = vmatprep.subr.mxu0 0.0
        %723 = vmatpush1.xpose.msra.mxu0 0.0
        %724 = vmatprep.subr.mxu0 0.0
        %725 = vmatpush1.xpose.msra.mxu0 0.0
        %726 = vmatprep.subr.mxu0 0.0
        %727 = vmatpush1.xpose.msra.mxu0 0.0
        %728 = vmatprep.subr.mxu0 0.0
        %729 = vmatpush1.xpose.msra.mxu0 0.0
        %730 = vmatprep.subr.mxu0 0.0
        %731 = vmatpush1.xpose.msra.mxu0 0.0
        %732 = vmatprep.mubr.f32.mxu0 0.0
        %733 = vmatmul.mubr.f32.gmra.mrb[0].mxu0 %v663
        %v734 = vpop.f32.mrb[0].mxu0
        %v735 = vadd.f32 0.0, %v734
        %v736 = vpop.f32.mrb[0].mxu0
        %737 = vdwg.mxu0
        %v738 = vsel %vm661, %v735, -inf
        %739 = vmax.xlane.f32.xlu0 %v738
        %v740 = vpop.xlane.xlu0 %739
        %v741 = vsub.f32 %v735, %v740
        %v742 = vmul.f32 %v741, 1.442695
        %v743 = vpow.pop %v742
        %v744 = vsel %vm661, %v743, 0.0
        %745 = vadd.xlane.f32.xlu0 %v744
        %v746 = vpop.xlane.xlu0 %745
        %v747 = vrcp.pop %v746
        %v748 = vmul.f32 %v743, %v747
        %749 = vrot.lane.b32.xlu0 %v660, 96
        %v750 = vpop.permute.xlu0 %749
        %v753 = vsel %vm661, %v748, 0
        %755 = vmatprep.subr.mxu0 0.0
        %756 = vmatpush1.msra.mxu0 %v750
        %757 = vmatprep.subr.mxu0 0.0
        %758 = vmatpush1.msra.mxu0 0.0
        %759 = vmatprep.subr.mxu0 0.0
        %760 = vmatpush1.msra.mxu0 0.0
        %761 = vmatprep.subr.mxu0 0.0
        %762 = vmatpush1.msra.mxu0 0.0
        %763 = vmatprep.subr.mxu0 0.0
        %764 = vmatpush1.msra.mxu0 0.0
        %765 = vmatprep.subr.mxu0 0.0
        %766 = vmatpush1.msra.mxu0 0.0
        %767 = vmatprep.subr.mxu0 0.0
        %768 = vmatpush1.msra.mxu0 0.0
        %769 = vmatprep.subr.mxu0 0.0
        %770 = vmatpush1.msra.mxu0 0.0
        %771 = vmatprep.subr.mxu0 0.0
        %772 = vmatpush1.msra.mxu0 0.0
        %773 = vmatprep.subr.mxu0 0.0
        %774 = vmatpush1.msra.mxu0 0.0
        %775 = vmatprep.subr.mxu0 0.0
        %776 = vmatpush1.msra.mxu0 0.0
        %777 = vmatprep.subr.mxu0 0.0
        %778 = vmatpush1.msra.mxu0 0.0
        %779 = vmatprep.subr.mxu0 0.0
        %780 = vmatpush1.msra.mxu0 0.0
        %781 = vmatprep.subr.mxu0 0.0
        %782 = vmatpush1.msra.mxu0 0.0
        %783 = vmatprep.subr.mxu0 0.0
        %784 = vmatpush1.msra.mxu0 0.0
        %785 = vmatprep.subr.mxu0 0.0
        %786 = vmatpush1.msra.mxu0 0.0
        %787 = vmatprep.subr.mxu0 0.0
        %788 = vmatpush1.msra.mxu0 0.0
        %789 = vmatprep.subr.mxu0 0.0
        %790 = vmatpush1.msra.mxu0 0.0
        %791 = vmatprep.subr.mxu0 0.0
        %792 = vmatpush1.msra.mxu0 0.0
        %793 = vmatprep.subr.mxu0 0.0
        %794 = vmatpush1.msra.mxu0 0.0
        %795 = vmatprep.subr.mxu0 0.0
        %796 = vmatpush1.msra.mxu0 0.0
        %797 = vmatprep.subr.mxu0 0.0
        %798 = vmatpush1.msra.mxu0 0.0
        %799 = vmatprep.subr.mxu0 0.0
        %800 = vmatpush1.msra.mxu0 0.0
        %801 = vmatprep.subr.mxu0 0.0
        %802 = vmatpush1.msra.mxu0 0.0
        %803 = vmatprep.subr.mxu0 0.0
        %804 = vmatpush1.msra.mxu0 0.0
        %805 = vmatprep.subr.mxu0 0.0
        %806 = vmatpush1.msra.mxu0 0.0
        %807 = vmatprep.subr.mxu0 0.0
        %808 = vmatpush1.msra.mxu0 0.0
        %809 = vmatprep.subr.mxu0 0.0
        %810 = vmatpush1.msra.mxu0 0.0
        %811 = vmatprep.subr.mxu0 0.0
        %812 = vmatpush1.msra.mxu0 0.0
        %813 = vmatprep.subr.mxu0 0.0
        %814 = vmatpush1.msra.mxu0 0.0
        %815 = vmatprep.subr.mxu0 0.0
        %816 = vmatpush1.msra.mxu0 0.0
        %817 = vmatprep.subr.mxu0 0.0
        %818 = vmatpush1.msra.mxu0 0.0
        %819 = vmatprep.mubr.f32.mxu0 0.0
        %820 = vmatmul.mubr.f32.gmra.mrb[0].mxu0 %v753
        %v821 = vpop.f32.mrb[0].mxu0
        %v822 = vadd.f32 0.0, %v821
        %v823 = vpop.f32.mrb[0].mxu0
        %824 = vdwg.mxu0
        %v825 = vld [vmem:[#allocation4] sm:$0xff]
        %v826 = vld [vmem:[#allocation14] sm:$0xff]
        %v828 = vsel %vm661, %v822, 0
        %830 = vmatprep.subr.mxu0 0.0
        %831 = vmatpush1.msra.mxu0 %v826
        %832 = vmatprep.subr.mxu0 0.0
        %833 = vmatpush1.msra.mxu0 0.0
        %834 = vmatprep.subr.mxu0 0.0
        %835 = vmatpush1.msra.mxu0 0.0
        %836 = vmatprep.subr.mxu0 0.0
        %837 = vmatpush1.msra.mxu0 0.0
        %838 = vmatprep.subr.mxu0 0.0
        %839 = vmatpush1.msra.mxu0 0.0
        %840 = vmatprep.subr.mxu0 0.0
        %841 = vmatpush1.msra.mxu0 0.0
        %842 = vmatprep.subr.mxu0 0.0
        %843 = vmatpush1.msra.mxu0 0.0
        %844 = vmatprep.subr.mxu0 0.0
        %845 = vmatpush1.msra.mxu0 0.0
        %846 = vmatprep.subr.mxu0 0.0
        %847 = vmatpush1.msra.mxu0 0.0
        %848 = vmatprep.subr.mxu0 0.0
        %849 = vmatpush1.msra.mxu0 0.0
        %850 = vmatprep.subr.mxu0 0.0
        %851 = vmatpush1.msra.mxu0 0.0
        %852 = vmatprep.subr.mxu0 0.0
        %853 = vmatpush1.msra.mxu0 0.0
        %854 = vmatprep.subr.mxu0 0.0
        %855 = vmatpush1.msra.mxu0 0.0
        %856 = vmatprep.subr.mxu0 0.0
        %857 = vmatpush1.msra.mxu0 0.0
        %858 = vmatprep.subr.mxu0 0.0
        %859 = vmatpush1.msra.mxu0 0.0
        %860 = vmatprep.subr.mxu0 0.0
        %861 = vmatpush1.msra.mxu0 0.0
        %862 = vmatprep.subr.mxu0 0.0
        %863 = vmatpush1.msra.mxu0 0.0
        %864 = vmatprep.subr.mxu0 0.0
        %865 = vmatpush1.msra.mxu0 0.0
        %866 = vmatprep.subr.mxu0 0.0
        %867 = vmatpush1.msra.mxu0 0.0
        %868 = vmatprep.subr.mxu0 0.0
        %869 = vmatpush1.msra.mxu0 0.0
        %870 = vmatprep.subr.mxu0 0.0
        %871 = vmatpush1.msra.mxu0 0.0
        %872 = vmatprep.subr.mxu0 0.0
        %873 = vmatpush1.msra.mxu0 0.0
        %874 = vmatprep.subr.mxu0 0.0
        %875 = vmatpush1.msra.mxu0 0.0
        %876 = vmatprep.subr.mxu0 0.0
        %877 = vmatpush1.msra.mxu0 0.0
        %878 = vmatprep.subr.mxu0 0.0
        %879 = vmatpush1.msra.mxu0 0.0
        %880 = vmatprep.subr.mxu0 0.0
        %881 = vmatpush1.msra.mxu0 0.0
        %882 = vmatprep.subr.mxu0 0.0
        %883 = vmatpush1.msra.mxu0 0.0
        %884 = vmatprep.subr.mxu0 0.0
        %885 = vmatpush1.msra.mxu0 0.0
        %886 = vmatprep.subr.mxu0 0.0
        %887 = vmatpush1.msra.mxu0 0.0
        %888 = vmatprep.subr.mxu0 0.0
        %889 = vmatpush1.msra.mxu0 0.0
        %890 = vmatprep.subr.mxu0 0.0
        %891 = vmatpush1.msra.mxu0 0.0
        %892 = vmatprep.subr.mxu0 0.0
        %893 = vmatpush1.msra.mxu0 0.0
        %894 = vmatprep.mubr.f32.mxu0 0.0
        %895 = vmatmul.mubr.f32.gmra.mrb[0].mxu0 %v828
        %v896 = vpop.f32.mrb[0].mxu0
        %v897 = vadd.f32 0.0, %v896
        %v898 = vpop.f32.mrb[0].mxu0
        %899 = vdwg.mxu0
        %v900 = vadd.f32 %v825, %v897
        %901 = vst.msk [vmem:[#allocation4] sm:$0xff] %vm574, %v900
        %v902 = vld [vmem:[#allocation3] sm:$0xff]
        %v903 = vld [vmem:[#allocation2] sm:$0xff]
        %905 = vrot.lane.b32.xlu0 %v902, 120
        %v906 = vpop.permute.xlu0 %905
        %908 = vrot.lane.b32.xlu0 %v903, 120
        %v909 = vpop.permute.xlu0 %908
        %v910 = vsel %vm661, %v906, 0
        %v912 = vsel %vm661, %v909, 0
        %914 = vmatprep.subr.mxu0 0.0
        %915 = vmatpush1.xpose.msra.mxu0 %v912
        %916 = vmatprep.subr.mxu0 0.0
        %917 = vmatpush1.xpose.msra.mxu0 0.0
        %918 = vmatprep.subr.mxu0 0.0
        %919 = vmatpush1.xpose.msra.mxu0 0.0
        %920 = vmatprep.subr.mxu0 0.0
        %921 = vmatpush1.xpose.msra.mxu0 0.0
        %922 = vmatprep.subr.mxu0 0.0
        %923 = vmatpush1.xpose.msra.mxu0 0.0
        %924 = vmatprep.subr.mxu0 0.0
        %925 = vmatpush1.xpose.msra.mxu0 0.0
        %926 = vmatprep.subr.mxu0 0.0
        %927 = vmatpush1.xpose.msra.mxu0 0.0
        %928 = vmatprep.subr.mxu0 0.0
        %929 = vmatpush1.xpose.msra.mxu0 0.0
        %930 = vmatprep.subr.mxu0 0.0
        %931 = vmatpush1.xpose.msra.mxu0 0.0
        %932 = vmatprep.subr.mxu0 0.0
        %933 = vmatpush1.xpose.msra.mxu0 0.0
        %934 = vmatprep.subr.mxu0 0.0
        %935 = vmatpush1.xpose.msra.mxu0 0.0
        %936 = vmatprep.subr.mxu0 0.0
        %937 = vmatpush1.xpose.msra.mxu0 0.0
        %938 = vmatprep.subr.mxu0 0.0
        %939 = vmatpush1.xpose.msra.mxu0 0.0
        %940 = vmatprep.subr.mxu0 0.0
        %941 = vmatpush1.xpose.msra.mxu0 0.0
        %942 = vmatprep.subr.mxu0 0.0
        %943 = vmatpush1.xpose.msra.mxu0 0.0
        %944 = vmatprep.subr.mxu0 0.0
        %945 = vmatpush1.xpose.msra.mxu0 0.0
        %946 = vmatprep.subr.mxu0 0.0
        %947 = vmatpush1.xpose.msra.mxu0 0.0
        %948 = vmatprep.subr.mxu0 0.0
        %949 = vmatpush1.xpose.msra.mxu0 0.0
        %950 = vmatprep.subr.mxu0 0.0
        %951 = vmatpush1.xpose.msra.mxu0 0.0
        %952 = vmatprep.subr.mxu0 0.0
        %953 = vmatpush1.xpose.msra.mxu0 0.0
        %954 = vmatprep.subr.mxu0 0.0
        %955 = vmatpush1.xpose.msra.mxu0 0.0
        %956 = vmatprep.subr.mxu0 0.0
        %957 = vmatpush1.xpose.msra.mxu0 0.0
        %958 = vmatprep.subr.mxu0 0.0
        %959 = vmatpush1.xpose.msra.mxu0 0.0
        %960 = vmatprep.subr.mxu0 0.0
        %961 = vmatpush1.xpose.msra.mxu0 0.0
        %962 = vmatprep.subr.mxu0 0.0
        %963 = vmatpush1.xpose.msra.mxu0 0.0
        %964 = vmatprep.subr.mxu0 0.0
        %965 = vmatpush1.xpose.msra.mxu0 0.0
        %966 = vmatprep.subr.mxu0 0.0
        %967 = vmatpush1.xpose.msra.mxu0 0.0
        %968 = vmatprep.subr.mxu0 0.0
        %969 = vmatpush1.xpose.msra.mxu0 0.0
        %970 = vmatprep.subr.mxu0 0.0
        %971 = vmatpush1.xpose.msra.mxu0 0.0
        %972 = vmatprep.subr.mxu0 0.0
        %973 = vmatpush1.xpose.msra.mxu0 0.0
        %974 = vmatprep.subr.mxu0 0.0
        %975 = vmatpush1.xpose.msra.mxu0 0.0
        %976 = vmatprep.subr.mxu0 0.0
        %977 = vmatpush1.xpose.msra.mxu0 0.0
        %978 = vmatprep.mubr.f32.mxu0 0.0
        %979 = vmatmul.mubr.f32.gmra.mrb[0].mxu0 %v910
        %v980 = vpop.f32.mrb[0].mxu0
        %v981 = vadd.f32 0.0, %v980
        %v982 = vpop.f32.mrb[0].mxu0
        %983 = vdwg.mxu0
        %v984 = vsel %vm661, %v981, -inf
        %985 = vmax.xlane.f32.xlu0 %v984
        %v986 = vpop.xlane.xlu0 %985
        %v987 = vsub.f32 %v981, %v986
        %v988 = vmul.f32 %v987, 1.442695
        %v989 = vpow.pop %v988
        %v990 = vsel %vm661, %v989, 0.0
        %991 = vadd.xlane.f32.xlu0 %v990
        %v992 = vpop.xlane.xlu0 %991
        %v993 = vrcp.pop %v992
        %v994 = vmul.f32 %v989, %v993
        %995 = vrot.lane.b32.xlu0 %v903, 88
        %v996 = vpop.permute.xlu0 %995
        %v999 = vsel %vm661, %v994, 0
        %1001 = vmatprep.subr.mxu0 0.0
        %1002 = vmatpush1.msra.mxu0 %v996
        %1003 = vmatprep.subr.mxu0 0.0
        %1004 = vmatpush1.msra.mxu0 0.0
        %1005 = vmatprep.subr.mxu0 0.0
        %1006 = vmatpush1.msra.mxu0 0.0
        %1007 = vmatprep.subr.mxu0 0.0
        %1008 = vmatpush1.msra.mxu0 0.0
        %1009 = vmatprep.subr.mxu0 0.0
        %1010 = vmatpush1.msra.mxu0 0.0
        %1011 = vmatprep.subr.mxu0 0.0
        %1012 = vmatpush1.msra.mxu0 0.0
        %1013 = vmatprep.subr.mxu0 0.0
        %1014 = vmatpush1.msra.mxu0 0.0
        %1015 = vmatprep.subr.mxu0 0.0
        %1016 = vmatpush1.msra.mxu0 0.0
        %1017 = vmatprep.subr.mxu0 0.0
        %1018 = vmatpush1.msra.mxu0 0.0
        %1019 = vmatprep.subr.mxu0 0.0
        %1020 = vmatpush1.msra.mxu0 0.0
        %1021 = vmatprep.subr.mxu0 0.0
        %1022 = vmatpush1.msra.mxu0 0.0
        %1023 = vmatprep.subr.mxu0 0.0
        %1024 = vmatpush1.msra.mxu0 0.0
        %1025 = vmatprep.subr.mxu0 0.0
        %1026 = vmatpush1.msra.mxu0 0.0
        %1027 = vmatprep.subr.mxu0 0.0
        %1028 = vmatpush1.msra.mxu0 0.0
        %1029 = vmatprep.subr.mxu0 0.0
        %1030 = vmatpush1.msra.mxu0 0.0
        %1031 = vmatprep.subr.mxu0 0.0
        %1032 = vmatpush1.msra.mxu0 0.0
        %1033 = vmatprep.subr.mxu0 0.0
        %1034 = vmatpush1.msra.mxu0 0.0
        %1035 = vmatprep.subr.mxu0 0.0
        %1036 = vmatpush1.msra.mxu0 0.0
        %1037 = vmatprep.subr.mxu0 0.0
        %1038 = vmatpush1.msra.mxu0 0.0
        %1039 = vmatprep.subr.mxu0 0.0
        %1040 = vmatpush1.msra.mxu0 0.0
        %1041 = vmatprep.subr.mxu0 0.0
        %1042 = vmatpush1.msra.mxu0 0.0
        %1043 = vmatprep.subr.mxu0 0.0
        %1044 = vmatpush1.msra.mxu0 0.0
        %1045 = vmatprep.subr.mxu0 0.0
        %1046 = vmatpush1.msra.mxu0 0.0
        %1047 = vmatprep.subr.mxu0 0.0
        %1048 = vmatpush1.msra.mxu0 0.0
        %1049 = vmatprep.subr.mxu0 0.0
        %1050 = vmatpush1.msra.mxu0 0.0
        %1051 = vmatprep.subr.mxu0 0.0
        %1052 = vmatpush1.msra.mxu0 0.0
        %1053 = vmatprep.subr.mxu0 0.0
        %1054 = vmatpush1.msra.mxu0 0.0
        %1055 = vmatprep.subr.mxu0 0.0
        %1056 = vmatpush1.msra.mxu0 0.0
        %1057 = vmatprep.subr.mxu0 0.0
        %1058 = vmatpush1.msra.mxu0 0.0
        %1059 = vmatprep.subr.mxu0 0.0
        %1060 = vmatpush1.msra.mxu0 0.0
        %1061 = vmatprep.subr.mxu0 0.0
        %1062 = vmatpush1.msra.mxu0 0.0
        %1063 = vmatprep.subr.mxu0 0.0
        %1064 = vmatpush1.msra.mxu0 0.0
        %1065 = vmatprep.mubr.f32.mxu0 0.0
        %1066 = vmatmul.mubr.f32.gmra.mrb[0].mxu0 %v999
        %v1067 = vpop.f32.mrb[0].mxu0
        %v1068 = vadd.f32 0.0, %v1067
        %v1069 = vpop.f32.mrb[0].mxu0
        %1070 = vdwg.mxu0
        %v1071 = vld [vmem:[#allocation4] sm:$0xff]
        %v1072 = vld [vmem:[#allocation14 + $0x8] sm:$0xff]
        %v1074 = vsel %vm661, %v1068, 0
        %1076 = vmatprep.subr.mxu0 0.0
        %1077 = vmatpush1.msra.mxu0 %v1072
        %1078 = vmatprep.subr.mxu0 0.0
        %1079 = vmatpush1.msra.mxu0 0.0
        %1080 = vmatprep.subr.mxu0 0.0
        %1081 = vmatpush1.msra.mxu0 0.0
        %1082 = vmatprep.subr.mxu0 0.0
        %1083 = vmatpush1.msra.mxu0 0.0
        %1084 = vmatprep.subr.mxu0 0.0
        %1085 = vmatpush1.msra.mxu0 0.0
        %1086 = vmatprep.subr.mxu0 0.0
        %1087 = vmatpush1.msra.mxu0 0.0
        %1088 = vmatprep.subr.mxu0 0.0
        %1089 = vmatpush1.msra.mxu0 0.0
        %1090 = vmatprep.subr.mxu0 0.0
        %1091 = vmatpush1.msra.mxu0 0.0
        %1092 = vmatprep.subr.mxu0 0.0
        %1093 = vmatpush1.msra.mxu0 0.0
        %1094 = vmatprep.subr.mxu0 0.0
        %1095 = vmatpush1.msra.mxu0 0.0
        %1096 = vmatprep.subr.mxu0 0.0
        %1097 = vmatpush1.msra.mxu0 0.0
        %1098 = vmatprep.subr.mxu0 0.0
        %1099 = vmatpush1.msra.mxu0 0.0
        %1100 = vmatprep.subr.mxu0 0.0
        %1101 = vmatpush1.msra.mxu0 0.0
        %1102 = vmatprep.subr.mxu0 0.0
        %1103 = vmatpush1.msra.mxu0 0.0
        %1104 = vmatprep.subr.mxu0 0.0
        %1105 = vmatpush1.msra.mxu0 0.0
        %1106 = vmatprep.subr.mxu0 0.0
        %1107 = vmatpush1.msra.mxu0 0.0
        %1108 = vmatprep.subr.mxu0 0.0
        %1109 = vmatpush1.msra.mxu0 0.0
        %1110 = vmatprep.subr.mxu0 0.0
        %1111 = vmatpush1.msra.mxu0 0.0
        %1112 = vmatprep.subr.mxu0 0.0
        %1113 = vmatpush1.msra.mxu0 0.0
        %1114 = vmatprep.subr.mxu0 0.0
        %1115 = vmatpush1.msra.mxu0 0.0
        %1116 = vmatprep.subr.mxu0 0.0
        %1117 = vmatpush1.msra.mxu0 0.0
        %1118 = vmatprep.subr.mxu0 0.0
        %1119 = vmatpush1.msra.mxu0 0.0
        %1120 = vmatprep.subr.mxu0 0.0
        %1121 = vmatpush1.msra.mxu0 0.0
        %1122 = vmatprep.subr.mxu0 0.0
        %1123 = vmatpush1.msra.mxu0 0.0
        %1124 = vmatprep.subr.mxu0 0.0
        %1125 = vmatpush1.msra.mxu0 0.0
        %1126 = vmatprep.subr.mxu0 0.0
        %1127 = vmatpush1.msra.mxu0 0.0
        %1128 = vmatprep.subr.mxu0 0.0
        %1129 = vmatpush1.msra.mxu0 0.0
        %1130 = vmatprep.subr.mxu0 0.0
        %1131 = vmatpush1.msra.mxu0 0.0
        %1132 = vmatprep.subr.mxu0 0.0
        %1133 = vmatpush1.msra.mxu0 0.0
        %1134 = vmatprep.subr.mxu0 0.0
        %1135 = vmatpush1.msra.mxu0 0.0
        %1136 = vmatprep.subr.mxu0 0.0
        %1137 = vmatpush1.msra.mxu0 0.0
        %1138 = vmatprep.subr.mxu0 0.0
        %1139 = vmatpush1.msra.mxu0 0.0
        %1140 = vmatprep.mubr.f32.mxu0 0.0
        %1141 = vmatmul.mubr.f32.gmra.mrb[0].mxu0 %v1074
        %v1142 = vpop.f32.mrb[0].mxu0
        %v1143 = vadd.f32 0.0, %v1142
        %v1144 = vpop.f32.mrb[0].mxu0
        %1145 = vdwg.mxu0
        %v1146 = vadd.f32 %v1071, %v1143
        %1147 = vst.msk [vmem:[#allocation4] sm:$0xff] %vm574, %v1146
        %v1148 = vld [vmem:[#allocation3] sm:$0xff]
        %v1149 = vld [vmem:[#allocation2] sm:$0xff]
        %1151 = vrot.lane.b32.xlu0 %v1148, 112
        %v1152 = vpop.permute.xlu0 %1151
        %1154 = vrot.lane.b32.xlu0 %v1149, 112
        %v1155 = vpop.permute.xlu0 %1154
        %v1156 = vsel %vm661, %v1152, 0
        %v1158 = vsel %vm661, %v1155, 0
        %1160 = vmatprep.subr.mxu0 0.0
        %1161 = vmatpush1.xpose.msra.mxu0 %v1158
        %1162 = vmatprep.subr.mxu0 0.0
        %1163 = vmatpush1.xpose.msra.mxu0 0.0
        %1164 = vmatprep.subr.mxu0 0.0
        %1165 = vmatpush1.xpose.msra.mxu0 0.0
        %1166 = vmatprep.subr.mxu0 0.0
        %1167 = vmatpush1.xpose.msra.mxu0 0.0
        %1168 = vmatprep.subr.mxu0 0.0
        %1169 = vmatpush1.xpose.msra.mxu0 0.0
        %1170 = vmatprep.subr.mxu0 0.0
        %1171 = vmatpush1.xpose.msra.mxu0 0.0
        %1172 = vmatprep.subr.mxu0 0.0
        %1173 = vmatpush1.xpose.msra.mxu0 0.0
        %1174 = vmatprep.subr.mxu0 0.0
        %1175 = vmatpush1.xpose.msra.mxu0 0.0
        %1176 = vmatprep.subr.mxu0 0.0
        %1177 = vmatpush1.xpose.msra.mxu0 0.0
        %1178 = vmatprep.subr.mxu0 0.0
        %1179 = vmatpush1.xpose.msra.mxu0 0.0
        %1180 = vmatprep.subr.mxu0 0.0
        %1181 = vmatpush1.xpose.msra.mxu0 0.0
        %1182 = vmatprep.subr.mxu0 0.0
        %1183 = vmatpush1.xpose.msra.mxu0 0.0
        %1184 = vmatprep.subr.mxu0 0.0
        %1185 = vmatpush1.xpose.msra.mxu0 0.0
        %1186 = vmatprep.subr.mxu0 0.0
        %1187 = vmatpush1.xpose.msra.mxu0 0.0
        %1188 = vmatprep.subr.mxu0 0.0
        %1189 = vmatpush1.xpose.msra.mxu0 0.0
        %1190 = vmatprep.subr.mxu0 0.0
        %1191 = vmatpush1.xpose.msra.mxu0 0.0
        %1192 = vmatprep.subr.mxu0 0.0
        %1193 = vmatpush1.xpose.msra.mxu0 0.0
        %1194 = vmatprep.subr.mxu0 0.0
        %1195 = vmatpush1.xpose.msra.mxu0 0.0
        %1196 = vmatprep.subr.mxu0 0.0
        %1197 = vmatpush1.xpose.msra.mxu0 0.0
        %1198 = vmatprep.subr.mxu0 0.0
        %1199 = vmatpush1.xpose.msra.mxu0 0.0
        %1200 = vmatprep.subr.mxu0 0.0
        %1201 = vmatpush1.xpose.msra.mxu0 0.0
        %1202 = vmatprep.subr.mxu0 0.0
        %1203 = vmatpush1.xpose.msra.mxu0 0.0
        %1204 = vmatprep.subr.mxu0 0.0
        %1205 = vmatpush1.xpose.msra.mxu0 0.0
        %1206 = vmatprep.subr.mxu0 0.0
        %1207 = vmatpush1.xpose.msra.mxu0 0.0
        %1208 = vmatprep.subr.mxu0 0.0
        %1209 = vmatpush1.xpose.msra.mxu0 0.0
        %1210 = vmatprep.subr.mxu0 0.0
        %1211 = vmatpush1.xpose.msra.mxu0 0.0
        %1212 = vmatprep.subr.mxu0 0.0
        %1213 = vmatpush1.xpose.msra.mxu0 0.0
        %1214 = vmatprep.subr.mxu0 0.0
        %1215 = vmatpush1.xpose.msra.mxu0 0.0
        %1216 = vmatprep.subr.mxu0 0.0
        %1217 = vmatpush1.xpose.msra.mxu0 0.0
        %1218 = vmatprep.subr.mxu0 0.0
        %1219 = vmatpush1.xpose.msra.mxu0 0.0
        %1220 = vmatprep.subr.mxu0 0.0
        %1221 = vmatpush1.xpose.msra.mxu0 0.0
        %1222 = vmatprep.subr.mxu0 0.0
        %1223 = vmatpush1.xpose.msra.mxu0 0.0
        %1224 = vmatprep.mubr.f32.mxu0 0.0
        %1225 = vmatmul.mubr.f32.gmra.mrb[0].mxu0 %v1156
        %v1226 = vpop.f32.mrb[0].mxu0
        %v1227 = vadd.f32 0.0, %v1226
        %v1228 = vpop.f32.mrb[0].mxu0
        %1229 = vdwg.mxu0
        %v1230 = vsel %vm661, %v1227, -inf
        %1231 = vmax.xlane.f32.xlu0 %v1230
        %v1232 = vpop.xlane.xlu0 %1231
        %v1233 = vsub.f32 %v1227, %v1232
        %v1234 = vmul.f32 %v1233, 1.442695
        %v1235 = vpow.pop %v1234
        %v1236 = vsel %vm661, %v1235, 0.0
        %1237 = vadd.xlane.f32.xlu0 %v1236
        %v1238 = vpop.xlane.xlu0 %1237
        %v1239 = vrcp.pop %v1238
        %v1240 = vmul.f32 %v1235, %v1239
        %1241 = vrot.lane.b32.xlu0 %v1149, 80
        %v1242 = vpop.permute.xlu0 %1241
        %v1245 = vsel %vm661, %v1240, 0
        %1247 = vmatprep.subr.mxu0 0.0
        %1248 = vmatpush1.msra.mxu0 %v1242
        %1249 = vmatprep.subr.mxu0 0.0
        %1250 = vmatpush1.msra.mxu0 0.0
        %1251 = vmatprep.subr.mxu0 0.0
        %1252 = vmatpush1.msra.mxu0 0.0
        %1253 = vmatprep.subr.mxu0 0.0
        %1254 = vmatpush1.msra.mxu0 0.0
        %1255 = vmatprep.subr.mxu0 0.0
        %1256 = vmatpush1.msra.mxu0 0.0
        %1257 = vmatprep.subr.mxu0 0.0
        %1258 = vmatpush1.msra.mxu0 0.0
        %1259 = vmatprep.subr.mxu0 0.0
        %1260 = vmatpush1.msra.mxu0 0.0
        %1261 = vmatprep.subr.mxu0 0.0
        %1262 = vmatpush1.msra.mxu0 0.0
        %1263 = vmatprep.subr.mxu0 0.0
        %1264 = vmatpush1.msra.mxu0 0.0
        %1265 = vmatprep.subr.mxu0 0.0
        %1266 = vmatpush1.msra.mxu0 0.0
        %1267 = vmatprep.subr.mxu0 0.0
        %1268 = vmatpush1.msra.mxu0 0.0
        %1269 = vmatprep.subr.mxu0 0.0
        %1270 = vmatpush1.msra.mxu0 0.0
        %1271 = vmatprep.subr.mxu0 0.0
        %1272 = vmatpush1.msra.mxu0 0.0
        %1273 = vmatprep.subr.mxu0 0.0
        %1274 = vmatpush1.msra.mxu0 0.0
        %1275 = vmatprep.subr.mxu0 0.0
        %1276 = vmatpush1.msra.mxu0 0.0
        %1277 = vmatprep.subr.mxu0 0.0
        %1278 = vmatpush1.msra.mxu0 0.0
        %1279 = vmatprep.subr.mxu0 0.0
        %1280 = vmatpush1.msra.mxu0 0.0
        %1281 = vmatprep.subr.mxu0 0.0
        %1282 = vmatpush1.msra.mxu0 0.0
        %1283 = vmatprep.subr.mxu0 0.0
        %1284 = vmatpush1.msra.mxu0 0.0
        %1285 = vmatprep.subr.mxu0 0.0
        %1286 = vmatpush1.msra.mxu0 0.0
        %1287 = vmatprep.subr.mxu0 0.0
        %1288 = vmatpush1.msra.mxu0 0.0
        %1289 = vmatprep.subr.mxu0 0.0
        %1290 = vmatpush1.msra.mxu0 0.0
        %1291 = vmatprep.subr.mxu0 0.0
        %1292 = vmatpush1.msra.mxu0 0.0
        %1293 = vmatprep.subr.mxu0 0.0
        %1294 = vmatpush1.msra.mxu0 0.0
        %1295 = vmatprep.subr.mxu0 0.0
        %1296 = vmatpush1.msra.mxu0 0.0
        %1297 = vmatprep.subr.mxu0 0.0
        %1298 = vmatpush1.msra.mxu0 0.0
        %1299 = vmatprep.subr.mxu0 0.0
        %1300 = vmatpush1.msra.mxu0 0.0
        %1301 = vmatprep.subr.mxu0 0.0
        %1302 = vmatpush1.msra.mxu0 0.0
        %1303 = vmatprep.subr.mxu0 0.0
        %1304 = vmatpush1.msra.mxu0 0.0
        %1305 = vmatprep.subr.mxu0 0.0
        %1306 = vmatpush1.msra.mxu0 0.0
        %1307 = vmatprep.subr.mxu0 0.0
        %1308 = vmatpush1.msra.mxu0 0.0
        %1309 = vmatprep.subr.mxu0 0.0
        %1310 = vmatpush1.msra.mxu0 0.0
        %1311 = vmatprep.mubr.f32.mxu0 0.0
        %1312 = vmatmul.mubr.f32.gmra.mrb[0].mxu0 %v1245
        %v1313 = vpop.f32.mrb[0].mxu0
        %v1314 = vadd.f32 0.0, %v1313
        %v1315 = vpop.f32.mrb[0].mxu0
        %1316 = vdwg.mxu0
        %v1317 = vld [vmem:[#allocation4] sm:$0xff]
        %v1318 = vld [vmem:[#allocation14 + $0x10] sm:$0xff]
        %v1320 = vsel %vm661, %v1314, 0
        %1322 = vmatprep.subr.mxu0 0.0
        %1323 = vmatpush1.msra.mxu0 %v1318
        %1324 = vmatprep.subr.mxu0 0.0
        %1325 = vmatpush1.msra.mxu0 0.0
        %1326 = vmatprep.subr.mxu0 0.0
        %1327 = vmatpush1.msra.mxu0 0.0
        %1328 = vmatprep.subr.mxu0 0.0
        %1329 = vmatpush1.msra.mxu0 0.0
        %1330 = vmatprep.subr.mxu0 0.0
        %1331 = vmatpush1.msra.mxu0 0.0
        %1332 = vmatprep.subr.mxu0 0.0
        %1333 = vmatpush1.msra.mxu0 0.0
        %1334 = vmatprep.subr.mxu0 0.0
        %1335 = vmatpush1.msra.mxu0 0.0
        %1336 = vmatprep.subr.mxu0 0.0
        %1337 = vmatpush1.msra.mxu0 0.0
        %1338 = vmatprep.subr.mxu0 0.0
        %1339 = vmatpush1.msra.mxu0 0.0
        %1340 = vmatprep.subr.mxu0 0.0
        %1341 = vmatpush1.msra.mxu0 0.0
        %1342 = vmatprep.subr.mxu0 0.0
        %1343 = vmatpush1.msra.mxu0 0.0
        %1344 = vmatprep.subr.mxu0 0.0
        %1345 = vmatpush1.msra.mxu0 0.0
        %1346 = vmatprep.subr.mxu0 0.0
        %1347 = vmatpush1.msra.mxu0 0.0
        %1348 = vmatprep.subr.mxu0 0.0
        %1349 = vmatpush1.msra.mxu0 0.0
        %1350 = vmatprep.subr.mxu0 0.0
        %1351 = vmatpush1.msra.mxu0 0.0
        %1352 = vmatprep.subr.mxu0 0.0
        %1353 = vmatpush1.msra.mxu0 0.0
        %1354 = vmatprep.subr.mxu0 0.0
        %1355 = vmatpush1.msra.mxu0 0.0
        %1356 = vmatprep.subr.mxu0 0.0
        %1357 = vmatpush1.msra.mxu0 0.0
        %1358 = vmatprep.subr.mxu0 0.0
        %1359 = vmatpush1.msra.mxu0 0.0
        %1360 = vmatprep.subr.mxu0 0.0
        %1361 = vmatpush1.msra.mxu0 0.0
        %1362 = vmatprep.subr.mxu0 0.0
        %1363 = vmatpush1.msra.mxu0 0.0
        %1364 = vmatprep.subr.mxu0 0.0
        %1365 = vmatpush1.msra.mxu0 0.0
        %1366 = vmatprep.subr.mxu0 0.0
        %1367 = vmatpush1.msra.mxu0 0.0
        %1368 = vmatprep.subr.mxu0 0.0
        %1369 = vmatpush1.msra.mxu0 0.0
        %1370 = vmatprep.subr.mxu0 0.0
        %1371 = vmatpush1.msra.mxu0 0.0
        %1372 = vmatprep.subr.mxu0 0.0
        %1373 = vmatpush1.msra.mxu0 0.0
        %1374 = vmatprep.subr.mxu0 0.0
        %1375 = vmatpush1.msra.mxu0 0.0
        %1376 = vmatprep.subr.mxu0 0.0
        %1377 = vmatpush1.msra.mxu0 0.0
        %1378 = vmatprep.subr.mxu0 0.0
        %1379 = vmatpush1.msra.mxu0 0.0
        %1380 = vmatprep.subr.mxu0 0.0
        %1381 = vmatpush1.msra.mxu0 0.0
        %1382 = vmatprep.subr.mxu0 0.0
        %1383 = vmatpush1.msra.mxu0 0.0
        %1384 = vmatprep.subr.mxu0 0.0
        %1385 = vmatpush1.msra.mxu0 0.0
        %1386 = vmatprep.mubr.f32.mxu0 0.0
        %1387 = vmatmul.mubr.f32.gmra.mrb[0].mxu0 %v1320
        %v1388 = vpop.f32.mrb[0].mxu0
        %v1389 = vadd.f32 0.0, %v1388
        %v1390 = vpop.f32.mrb[0].mxu0
        %1391 = vdwg.mxu0
        %v1392 = vadd.f32 %v1317, %v1389
        %1393 = vst.msk [vmem:[#allocation4] sm:$0xff] %vm574, %v1392
        %v1394 = vld [vmem:[#allocation3] sm:$0xff]
        %v1395 = vld [vmem:[#allocation2] sm:$0xff]
        %1397 = vrot.lane.b32.xlu0 %v1394, 104
        %v1398 = vpop.permute.xlu0 %1397
        %1400 = vrot.lane.b32.xlu0 %v1395, 104
        %v1401 = vpop.permute.xlu0 %1400
        %v1402 = vsel %vm661, %v1398, 0
        %v1404 = vsel %vm661, %v1401, 0
        %1406 = vmatprep.subr.mxu0 0.0
        %1407 = vmatpush1.xpose.msra.mxu0 %v1404
        %1408 = vmatprep.subr.mxu0 0.0
        %1409 = vmatpush1.xpose.msra.mxu0 0.0
        %1410 = vmatprep.subr.mxu0 0.0
        %1411 = vmatpush1.xpose.msra.mxu0 0.0
        %1412 = vmatprep.subr.mxu0 0.0
        %1413 = vmatpush1.xpose.msra.mxu0 0.0
        %1414 = vmatprep.subr.mxu0 0.0
        %1415 = vmatpush1.xpose.msra.mxu0 0.0
        %1416 = vmatprep.subr.mxu0 0.0
        %1417 = vmatpush1.xpose.msra.mxu0 0.0
        %1418 = vmatprep.subr.mxu0 0.0
        %1419 = vmatpush1.xpose.msra.mxu0 0.0
        %1420 = vmatprep.subr.mxu0 0.0
        %1421 = vmatpush1.xpose.msra.mxu0 0.0
        %1422 = vmatprep.subr.mxu0 0.0
        %1423 = vmatpush1.xpose.msra.mxu0 0.0
        %1424 = vmatprep.subr.mxu0 0.0
        %1425 = vmatpush1.xpose.msra.mxu0 0.0
        %1426 = vmatprep.subr.mxu0 0.0
        %1427 = vmatpush1.xpose.msra.mxu0 0.0
        %1428 = vmatprep.subr.mxu0 0.0
        %1429 = vmatpush1.xpose.msra.mxu0 0.0
        %1430 = vmatprep.subr.mxu0 0.0
        %1431 = vmatpush1.xpose.msra.mxu0 0.0
        %1432 = vmatprep.subr.mxu0 0.0
        %1433 = vmatpush1.xpose.msra.mxu0 0.0
        %1434 = vmatprep.subr.mxu0 0.0
        %1435 = vmatpush1.xpose.msra.mxu0 0.0
        %1436 = vmatprep.subr.mxu0 0.0
        %1437 = vmatpush1.xpose.msra.mxu0 0.0
        %1438 = vmatprep.subr.mxu0 0.0
        %1439 = vmatpush1.xpose.msra.mxu0 0.0
        %1440 = vmatprep.subr.mxu0 0.0
        %1441 = vmatpush1.xpose.msra.mxu0 0.0
        %1442 = vmatprep.subr.mxu0 0.0
        %1443 = vmatpush1.xpose.msra.mxu0 0.0
        %1444 = vmatprep.subr.mxu0 0.0
        %1445 = vmatpush1.xpose.msra.mxu0 0.0
        %1446 = vmatprep.subr.mxu0 0.0
        %1447 = vmatpush1.xpose.msra.mxu0 0.0
        %1448 = vmatprep.subr.mxu0 0.0
        %1449 = vmatpush1.xpose.msra.mxu0 0.0
        %1450 = vmatprep.subr.mxu0 0.0
        %1451 = vmatpush1.xpose.msra.mxu0 0.0
        %1452 = vmatprep.subr.mxu0 0.0
        %1453 = vmatpush1.xpose.msra.mxu0 0.0
        %1454 = vmatprep.subr.mxu0 0.0
        %1455 = vmatpush1.xpose.msra.mxu0 0.0
        %1456 = vmatprep.subr.mxu0 0.0
        %1457 = vmatpush1.xpose.msra.mxu0 0.0
        %1458 = vmatprep.subr.mxu0 0.0
        %1459 = vmatpush1.xpose.msra.mxu0 0.0
        %1460 = vmatprep.subr.mxu0 0.0
        %1461 = vmatpush1.xpose.msra.mxu0 0.0
        %1462 = vmatprep.subr.mxu0 0.0
        %1463 = vmatpush1.xpose.msra.mxu0 0.0
        %1464 = vmatprep.subr.mxu0 0.0
        %1465 = vmatpush1.xpose.msra.mxu0 0.0
        %1466 = vmatprep.subr.mxu0 0.0
        %1467 = vmatpush1.xpose.msra.mxu0 0.0
        %1468 = vmatprep.subr.mxu0 0.0
        %1469 = vmatpush1.xpose.msra.mxu0 0.0
        %1470 = vmatprep.mubr.f32.mxu0 0.0
        %1471 = vmatmul.mubr.f32.gmra.mrb[0].mxu0 %v1402
        %v1472 = vpop.f32.mrb[0].mxu0
        %v1473 = vadd.f32 0.0, %v1472
        %v1474 = vpop.f32.mrb[0].mxu0
        %1475 = vdwg.mxu0
        %v1476 = vsel %vm661, %v1473, -inf
        %1477 = vmax.xlane.f32.xlu0 %v1476
        %v1478 = vpop.xlane.xlu0 %1477
        %v1479 = vsub.f32 %v1473, %v1478
        %v1480 = vmul.f32 %v1479, 1.442695
        %v1481 = vpow.pop %v1480
        %v1482 = vsel %vm661, %v1481, 0.0
        %1483 = vadd.xlane.f32.xlu0 %v1482
        %v1484 = vpop.xlane.xlu0 %1483
        %v1485 = vrcp.pop %v1484
        %v1486 = vmul.f32 %v1481, %v1485
        %1487 = vrot.lane.b32.xlu0 %v1395, 72
        %v1488 = vpop.permute.xlu0 %1487
        %v1491 = vsel %vm661, %v1486, 0
        %1493 = vmatprep.subr.mxu0 0.0
        %1494 = vmatpush1.msra.mxu0 %v1488
        %1495 = vmatprep.subr.mxu0 0.0
        %1496 = vmatpush1.msra.mxu0 0.0
        %1497 = vmatprep.subr.mxu0 0.0
        %1498 = vmatpush1.msra.mxu0 0.0
        %1499 = vmatprep.subr.mxu0 0.0
        %1500 = vmatpush1.msra.mxu0 0.0
        %1501 = vmatprep.subr.mxu0 0.0
        %1502 = vmatpush1.msra.mxu0 0.0
        %1503 = vmatprep.subr.mxu0 0.0
        %1504 = vmatpush1.msra.mxu0 0.0
        %1505 = vmatprep.subr.mxu0 0.0
        %1506 = vmatpush1.msra.mxu0 0.0
        %1507 = vmatprep.subr.mxu0 0.0
        %1508 = vmatpush1.msra.mxu0 0.0
        %1509 = vmatprep.subr.mxu0 0.0
        %1510 = vmatpush1.msra.mxu0 0.0
        %1511 = vmatprep.subr.mxu0 0.0
        %1512 = vmatpush1.msra.mxu0 0.0
        %1513 = vmatprep.subr.mxu0 0.0
        %1514 = vmatpush1.msra.mxu0 0.0
        %1515 = vmatprep.subr.mxu0 0.0
        %1516 = vmatpush1.msra.mxu0 0.0
        %1517 = vmatprep.subr.mxu0 0.0
        %1518 = vmatpush1.msra.mxu0 0.0
        %1519 = vmatprep.subr.mxu0 0.0
        %1520 = vmatpush1.msra.mxu0 0.0
        %1521 = vmatprep.subr.mxu0 0.0
        %1522 = vmatpush1.msra.mxu0 0.0
        %1523 = vmatprep.subr.mxu0 0.0
        %1524 = vmatpush1.msra.mxu0 0.0
        %1525 = vmatprep.subr.mxu0 0.0
        %1526 = vmatpush1.msra.mxu0 0.0
        %1527 = vmatprep.subr.mxu0 0.0
        %1528 = vmatpush1.msra.mxu0 0.0
        %1529 = vmatprep.subr.mxu0 0.0
        %1530 = vmatpush1.msra.mxu0 0.0
        %1531 = vmatprep.subr.mxu0 0.0
        %1532 = vmatpush1.msra.mxu0 0.0
        %1533 = vmatprep.subr.mxu0 0.0
        %1534 = vmatpush1.msra.mxu0 0.0
        %1535 = vmatprep.subr.mxu0 0.0
        %1536 = vmatpush1.msra.mxu0 0.0
        %1537 = vmatprep.subr.mxu0 0.0
        %1538 = vmatpush1.msra.mxu0 0.0
        %1539 = vmatprep.subr.mxu0 0.0
        %1540 = vmatpush1.msra.mxu0 0.0
        %1541 = vmatprep.subr.mxu0 0.0
        %1542 = vmatpush1.msra.mxu0 0.0
        %1543 = vmatprep.subr.mxu0 0.0
        %1544 = vmatpush1.msra.mxu0 0.0
        %1545 = vmatprep.subr.mxu0 0.0
        %1546 = vmatpush1.msra.mxu0 0.0
        %1547 = vmatprep.subr.mxu0 0.0
        %1548 = vmatpush1.msra.mxu0 0.0
        %1549 = vmatprep.subr.mxu0 0.0
        %1550 = vmatpush1.msra.mxu0 0.0
        %1551 = vmatprep.subr.mxu0 0.0
        %1552 = vmatpush1.msra.mxu0 0.0
        %1553 = vmatprep.subr.mxu0 0.0
        %1554 = vmatpush1.msra.mxu0 0.0
        %1555 = vmatprep.subr.mxu0 0.0
        %1556 = vmatpush1.msra.mxu0 0.0
        %1557 = vmatprep.mubr.f32.mxu0 0.0
        %1558 = vmatmul.mubr.f32.gmra.mrb[0].mxu0 %v1491
        %v1559 = vpop.f32.mrb[0].mxu0
        %v1560 = vadd.f32 0.0, %v1559
        %v1561 = vpop.f32.mrb[0].mxu0
        %1562 = vdwg.mxu0
        %v1563 = vld [vmem:[#allocation4] sm:$0xff]
        %v1564 = vld [vmem:[#allocation14 + $0x18] sm:$0xff]
        %v1566 = vsel %vm661, %v1560, 0
        %1568 = vmatprep.subr.mxu0 0.0
        %1569 = vmatpush1.msra.mxu0 %v1564
        %1570 = vmatprep.subr.mxu0 0.0
        %1571 = vmatpush1.msra.mxu0 0.0
        %1572 = vmatprep.subr.mxu0 0.0
        %1573 = vmatpush1.msra.mxu0 0.0
        %1574 = vmatprep.subr.mxu0 0.0
        %1575 = vmatpush1.msra.mxu0 0.0
        %1576 = vmatprep.subr.mxu0 0.0
        %1577 = vmatpush1.msra.mxu0 0.0
        %1578 = vmatprep.subr.mxu0 0.0
        %1579 = vmatpush1.msra.mxu0 0.0
        %1580 = vmatprep.subr.mxu0 0.0
        %1581 = vmatpush1.msra.mxu0 0.0
        %1582 = vmatprep.subr.mxu0 0.0
        %1583 = vmatpush1.msra.mxu0 0.0
        %1584 = vmatprep.subr.mxu0 0.0
        %1585 = vmatpush1.msra.mxu0 0.0
        %1586 = vmatprep.subr.mxu0 0.0
        %1587 = vmatpush1.msra.mxu0 0.0
        %1588 = vmatprep.subr.mxu0 0.0
        %1589 = vmatpush1.msra.mxu0 0.0
        %1590 = vmatprep.subr.mxu0 0.0
        %1591 = vmatpush1.msra.mxu0 0.0
        %1592 = vmatprep.subr.mxu0 0.0
        %1593 = vmatpush1.msra.mxu0 0.0
        %1594 = vmatprep.subr.mxu0 0.0
        %1595 = vmatpush1.msra.mxu0 0.0
        %1596 = vmatprep.subr.mxu0 0.0
        %1597 = vmatpush1.msra.mxu0 0.0
        %1598 = vmatprep.subr.mxu0 0.0
        %1599 = vmatpush1.msra.mxu0 0.0
        %1600 = vmatprep.subr.mxu0 0.0
        %1601 = vmatpush1.msra.mxu0 0.0
        %1602 = vmatprep.subr.mxu0 0.0
        %1603 = vmatpush1.msra.mxu0 0.0
        %1604 = vmatprep.subr.mxu0 0.0
        %1605 = vmatpush1.msra.mxu0 0.0
        %1606 = vmatprep.subr.mxu0 0.0
        %1607 = vmatpush1.msra.mxu0 0.0
        %1608 = vmatprep.subr.mxu0 0.0
        %1609 = vmatpush1.msra.mxu0 0.0
        %1610 = vmatprep.subr.mxu0 0.0
        %1611 = vmatpush1.msra.mxu0 0.0
        %1612 = vmatprep.subr.mxu0 0.0
        %1613 = vmatpush1.msra.mxu0 0.0
        %1614 = vmatprep.subr.mxu0 0.0
        %1615 = vmatpush1.msra.mxu0 0.0
        %1616 = vmatprep.subr.mxu0 0.0
        %1617 = vmatpush1.msra.mxu0 0.0
        %1618 = vmatprep.subr.mxu0 0.0
        %1619 = vmatpush1.msra.mxu0 0.0
        %1620 = vmatprep.subr.mxu0 0.0
        %1621 = vmatpush1.msra.mxu0 0.0
        %1622 = vmatprep.subr.mxu0 0.0
        %1623 = vmatpush1.msra.mxu0 0.0
        %1624 = vmatprep.subr.mxu0 0.0
        %1625 = vmatpush1.msra.mxu0 0.0
        %1626 = vmatprep.subr.mxu0 0.0
        %1627 = vmatpush1.msra.mxu0 0.0
        %1628 = vmatprep.subr.mxu0 0.0
        %1629 = vmatpush1.msra.mxu0 0.0
        %1630 = vmatprep.subr.mxu0 0.0
        %1631 = vmatpush1.msra.mxu0 0.0
        %1632 = vmatprep.mubr.f32.mxu0 0.0
        %1633 = vmatmul.mubr.f32.gmra.mrb[0].mxu0 %v1566
        %v1634 = vpop.f32.mrb[0].mxu0
        %v1635 = vadd.f32 0.0, %v1634
        %v1636 = vpop.f32.mrb[0].mxu0
        %1637 = vdwg.mxu0
        %v1638 = vadd.f32 %v1563, %v1635
        %1639 = vst.msk [vmem:[#allocation4] sm:$0xff] %vm574, %v1638
        %v1640 = vld [vmem:[#allocation4] sm:$0xff]
        %v1641 = vsel %vm574, %v1640, 0.0
        %1642 = vadd.xlane.f32.xlu0 %v1641
        %v1643 = vpop.xlane.xlu0 %1642
        %v1644 = vrcp.pop 32.0
        %v1645 = vmul.f32 %v1643, %v1644
        %v1646 = vsub.f32 %v1640, %v1645
        %v1647 = vmul.f32 %v1646, %v1646
        %v1648 = vsel %vm574, %v1647, 0.0
        %1649 = vadd.xlane.f32.xlu0 %v1648
        %v1650 = vpop.xlane.xlu0 %1649
        %v1651 = vmul.f32 %v1650, %v1644
        %v1652 = vadd.f32 %v1651, 1e-12
        %v1653 = vrsqrt.pop %v1652
        %v1654 = vmul.f32 %v1646, %v1653
        %v1655 = vld [vmem:[#allocation17] sm:$0x1]
        %v1657 = vlaneseq
        %v1658 = vshrl.u32 %v1657, 7
        %v1659 = vsub.s32 0, %v1658
        %v1660 = vrot.slane %v1655, %v1659
        %v1662 = vmul.f32 %v1654, %v1660
        %v1663 = vld [vmem:[#allocation19] sm:$0x1]
        %v1665 = vlaneseq
        %v1666 = vshrl.u32 %v1665, 7
        %v1667 = vsub.s32 0, %v1666
        %v1668 = vrot.slane %v1663, %v1667
        %v1670 = vadd.f32 %v1662, %v1668
        %1671 = vst.msk [vmem:[%s467] sm:$0xff] %vm574, %v1670
        %s1672 = sand.u32 %s246, 1
        %s1673 = scalar_lea.sflag [#allocation7], %s1672
        %s1674 = sand.u32 %s246, 1
        %s1675 = smul.addr %s1674, 8
        %s1676 = scalar_lea.vmem [#allocation20], %s1675
        // Predicated region
        $region97: #{tpu_custom_call.1} parent=55 // pred_check
          %p1677 = pneg %p256
        $region98: #{tpu_custom_call.1} parent=55 // pred_check_branch
          %1679 = sbr.rel (%p1677) target = $region100
        $region99: #{tpu_custom_call.1} parent=55 // pred_region
          %s1681 = ssub.s32 128, 128
          %1682 = vsyncadd %s1673, %s1681
          %s1683 = sadd.s32 %s35, %s34
          %s1684 = smul.addr %s1683, 128
          %s1685 = scalar_lea.hbm %s9, %s1684
          %s1687 = sshll.u32 %s1676, 4
          %s1688 = int_to_ptr.vmem [resolvable:$true] %s1687
          %1690 = dma.vmem_to_hbm [thread:$0]  %s1688, 128, %s1685, %s1673
        $region100: #{tpu_custom_call.1} parent=55 // pred_fallthru
          _
      $region56: #{tpu_custom_call.1} parent=5 // pred_fallthru
        _
      %p1691 = scmp.le.s32.totalorder 2, %s25
      // Predicated region
      $region101: #{tpu_custom_call.1} parent=5 // pred_check
        %p1692 = pneg %p1691
      $region102: #{tpu_custom_call.1} parent=5 // pred_check_branch
        %1694 = sbr.rel (%p1692) target = $region104
      $region103: #{tpu_custom_call.1} parent=5 // pred_region
        %s1695 = ssub.s32 %s25, 2
        // Predicated region
        $region105: #{tpu_custom_call.1} parent=103 // pred_check
          %p1696 = pneg %p262
        $region106: #{tpu_custom_call.1} parent=103 // pred_check_branch
          %1698 = sbr.rel (%p1696) target = $region108
        $region107: #{tpu_custom_call.1} parent=103 // pred_region
          %s1699 = sand.u32 %s247, 1
          %s1700 = scalar_lea.sflag [#allocation7], %s1699
          %s1701 = sand.u32 %s247, 1
          %s1702 = smul.addr %s1701, 8
          %s1703 = scalar_lea.vmem [#allocation20], %s1702
          %1704 = dma.done %s1700, 128
        $region108: #{tpu_custom_call.1} parent=103 // pred_fallthru
          _
      $region104: #{tpu_custom_call.1} parent=5 // pred_fallthru
        _
    $region6: #{tpu_custom_call.1} parent=1 // loop_footer
      %s29 = sadd.s32 1, %s25
    $region7: #{tpu_custom_call.1} parent=1 // loop_footer_branch
      %24 = sbr.rel target = $region3
    $region8: #{tpu_custom_call.1} parent=1 // loop_exit
      _
    %1705 = vsyncpa [#allocation6], 1
    %s1706 = scalar_lea.sflag [#allocation6], 1
    %1707 = vsyncpa %s1706, 1
    %1708 = vsyncpa [#allocation9], 1
    %1709 = vsyncpa [#allocation12], 1
    %1710 = vsyncpa [#allocation15], 1
    %1711 = vsyncpa [#allocation18], 1
    %1712 = vsyncpa [#allocation7], 1
    %s1713 = scalar_lea.sflag [#allocation7], 1
    %1714 = vsyncpa %s1713, 1

</llo_original>
